<compile_context>
chip_gen: v6e
topology: v6e:2x2x1
jax: 0.10.0
libtpu: 0.0.40
codegen_flags: <defaults>
</compile_context>

<pallas_src>
import jax
import jax.numpy as jnp
from jax.experimental import pallas as pl
from jax.experimental.pallas import tpu as pltpu

# ----------------------------- configuration --------------------------------
B = 2          # batch
T = 8          # encoder time steps
F = 32         # feature dim of input_features
H = 128        # hidden dim of the synthetic model
VM = 256       # model vocab size
VB = 384       # base model vocab size
S = 4          # current decoder sequence length
TOPK = 5       # topk_logits
MODEL_EOS = 2
# deterministic injective id-mapping (5 coprime with 384); eos -> base eos baked in
BASE_EOS = int((MODEL_EOS * 5 + 11) % VB)

BP = 8          # batch padded to a full sublane group (8) for vreg efficiency
IDS_LANES = 128  # lane-dense packed id output (lane 0 = orig id, lane 1 = mapped id)

# TODO(synk): the PyTorch forward skips `additional_special_tokens` and words
# missing from the base vocab (python string lookups); with an integer reverse
# lookup table every top-k token is mapped, so those data-dependent skips are
# omitted.
# TODO(synk): if this runs once per autoregressive decode step, the weights
# (w_enc/w_out) should stay resident in VMEM across steps (grid over decode
# steps or cross-call persistence); not done for this single-call demo.


# ------------------------------- kernel --------------------------------------
def align_kernel(x_ref, mask_ref, last_id_ref, w_enc_ref, emb_hbm_ref,
                 w_out_ref, rev_map_ref,
                 mapped_logits_ref, ids_ref,
                 emb_buf, dma_sem):
    # ---- gather only the BP needed embedding rows straight from HBM ---------
    # (issued first so the tiny DMAs overlap with the encoder compute)
    copies = []
    for b in range(BP):
        cp = pltpu.make_async_copy(emb_hbm_ref.at[last_id_ref[b]],
                                   emb_buf.at[b], dma_sem.at[b])
        cp.start()
        copies.append(cp)

    x = x_ref[...]                                   # [BP, T, F] f32
    mask = mask_ref[...]                             # [BP, T]    f32

    # ---- synthetic encoder: masked mean over time, project to H (MXU, bf16) --
    xsum = jnp.sum(x * mask[:, :, None], axis=1)                      # [BP, F]
    msum = jnp.maximum(jnp.sum(mask, axis=1, keepdims=True), 1.0)     # [BP, 1]
    enc = jnp.dot(xsum.astype(jnp.bfloat16), w_enc_ref[...],
                  preferred_element_type=jnp.float32) / msum          # [BP, H]

    # ---- synthetic decoder: gathered embedding rows --------------------------
    for cp in copies:
        cp.wait()
    emb = emb_buf[...]                                                # [BP, H] f32

    hidden = jnp.tanh(enc + emb)                                      # [BP, H]
    logits = jnp.dot(hidden.astype(jnp.bfloat16), w_out_ref[...],
                     preferred_element_type=jnp.float32)              # [BP, VM]

    # ---- top-k via iterative argmax; iteration 0 doubles as torch.max --------
    vm_iota = jax.lax.broadcasted_iota(jnp.int32, (BP, VM), 1)
    neg = jnp.finfo(jnp.float32).min                 # finite sentinel (not -inf)
    work = logits
    top_vals, top_idx = [], []
    for j in range(TOPK):
        m = jnp.max(work, axis=-1, keepdims=True)
        idx = jnp.min(jnp.where(work == m, vm_iota, VM),
                      axis=-1, keepdims=True)        # first-max tie-breaking
        top_vals.append(m)
        top_idx.append(idx)
        if j + 1 < TOPK:
            work = jnp.where(vm_iota == idx, neg, work)
    orig_idx = top_idx[0]                            # == torch.max over logits

    # ---- F.softmax over the TOPK logits (top_vals[0] is the running max) -----
    exps = [jnp.exp(v - top_vals[0]) for v in top_vals]
    denom = exps[0]
    for e in exps[1:]:
        denom = denom + e
    inv = pl.reciprocal(denom)                       # exact; one divide total
    probs = [e * inv for e in exps]                  # each [BP, 1]

    # ---- scatter mapped probabilities into the base vocab --------------------
    # rev_map[vb] = model id m with vocab_map[m] == vb, else -1.  Top-k indices
    # are distinct, so at most one j hits each base slot (matches torch's
    # indexing assignment for an injective vocab map).  Pure VPU compare/select.
    rev = rev_map_ref[...]                                            # [1, VB]
    mapped = jnp.zeros((BP, VB), jnp.float32)
    for j in range(TOPK):
        mapped = mapped + jnp.where(rev == top_idx[j], probs[j], 0.0)
    mapped_logits_ref[...] = mapped

    # ---- torch.max over mapped logits -> new mapped token id -----------------
    vb_iota = jax.lax.broadcasted_iota(jnp.int32, (BP, VB), 1)
    mm = jnp.max(mapped, axis=-1, keepdims=True)
    mapped_idx = jnp.min(jnp.where(mapped == mm, vb_iota, VB),
                         axis=-1, keepdims=True)

    # ---- single lane-dense id output (no masked partial stores) --------------
    lane = jax.lax.broadcasted_iota(jnp.int32, (BP, IDS_LANES), 1)
    ids_ref[...] = (jnp.where(lane == 0, orig_idx, 0)
                    + jnp.where(lane == 1, mapped_idx, 0))


# ------------------------------ wrapper ---------------------------------------
def _count_seq_end(ids, eos_id):
    """count_seq_end: number of rows that contain the eos token."""
    return jnp.sum(jnp.any(ids == eos_id, axis=-1).astype(jnp.int32))


@jax.jit
def align_forward(input_features, attention_mask, decoder_input_ids,
                  mapped_input_ids, w_enc, emb, w_out, rev_vocab_map):
    b = input_features.shape[0]
    pad = BP - b

    # pad batch to 8 sublanes (padded rows use mask=1 and token id 0; discarded)
    x = jnp.pad(input_features.astype(jnp.float32), ((0, pad), (0, 0), (0, 0)))
    am = jnp.pad(attention_mask.astype(jnp.float32), ((0, pad), (0, 0)),
                 constant_values=1.0)
    last_ids = jnp.pad(decoder_input_ids[:, -1].astype(jnp.int32), (0, pad))

    vmem = pl.BlockSpec(memory_space=pltpu.MemorySpace.VMEM)
    smem = pl.BlockSpec(memory_space=pltpu.MemorySpace.SMEM)
    hbm = pl.BlockSpec(memory_space=pl.ANY)          # emb stays in HBM; row-gather

    mapped_logits_p, ids_p = pl.pallas_call(
        align_kernel,
        out_shape=(
            jax.ShapeDtypeStruct((BP, VB), jnp.float32),       # mapped logits
            jax.ShapeDtypeStruct((BP, IDS_LANES), jnp.int32),  # packed new ids
        ),
        in_specs=[vmem, vmem, smem, vmem, hbm, vmem, vmem],
        out_specs=(vmem, vmem),
        scratch_shapes=[
            pltpu.VMEM((BP, H), jnp.float32),    # gathered embedding rows
            pltpu.SemaphoreType.DMA((BP,)),      # one DMA sem per row
        ],
    )(x, am, last_ids, w_enc, emb, w_out, rev_vocab_map)

    mapped_logits = mapped_logits_p[:b]
    new_orig_id = ids_p[:b, 0:1]
    new_mapped_id = ids_p[:b, 1:2]

    decoder_original_input_ids = jnp.concatenate(
        [decoder_input_ids, new_orig_id], axis=-1)
    original_seq_end_count = _count_seq_end(decoder_original_input_ids, MODEL_EOS)

    decoder_mapped_input_ids = jnp.concatenate(
        [mapped_input_ids, new_mapped_id], axis=-1)
    mapped_seq_end_count = _count_seq_end(decoder_mapped_input_ids, BASE_EOS)

    return (decoder_original_input_ids,
            original_seq_end_count == b,
            mapped_logits,
            decoder_mapped_input_ids,
            mapped_seq_end_count == b)


# ------------------------------ driver ----------------------------------------
if __name__ == "__main__":
    key = jax.random.PRNGKey(0)
    k_x, k_we, k_emb, k_wo, k_dec, k_map = jax.random.split(key, 6)

    # inputs
    input_features = jax.random.normal(k_x, (B, T, F), dtype=jnp.float32)
    attention_mask = jnp.ones((B, T), dtype=jnp.float32)
    decoder_input_ids = jax.random.randint(k_dec, (B, S), 0, VM, dtype=jnp.int32)
    mapped_input_ids = jax.random.randint(k_map, (B, S), 0, VB, dtype=jnp.int32)

    # deterministic synthetic model parameters (bf16 MXU operands for w_enc/w_out;
    # emb stays f32 since only B rows are DMA-gathered per call)
    w_enc = (0.1 * jax.random.normal(k_we, (F, H), dtype=jnp.float32)).astype(jnp.bfloat16)
    emb = 0.1 * jax.random.normal(k_emb, (VM, H), dtype=jnp.float32)
    w_out = (0.1 * jax.random.normal(k_wo, (H, VM), dtype=jnp.float32)).astype(jnp.bfloat16)

    # deterministic injective vocab mapping (model id -> base id), eos -> base eos
    # by construction, plus its dense reverse map (base id -> model id, -1 if none),
    # the integer analogue of the module's reverse_vocab_mapper.
    vocab_map = ((jnp.arange(VM, dtype=jnp.int32) * 5 + 11) % VB)
    rev_vocab_map = (jnp.full((VB,), -1, dtype=jnp.int32)
                     .at[vocab_map].set(jnp.arange(VM, dtype=jnp.int32))
                     .reshape(1, VB))

    outs = align_forward(input_features, attention_mask, decoder_input_ids,
                         mapped_input_ids, w_enc, emb, w_out, rev_vocab_map)
    outs = jax.block_until_ready(outs)

    (dec_orig_ids, orig_done, mapped_logits, dec_mapped_ids, mapped_done) = outs
    assert dec_orig_ids.shape == (B, S + 1)
    assert dec_mapped_ids.shape == (B, S + 1)
    assert mapped_logits.shape == (B, VB)
    print("KERNEL_OK")
</pallas_src>

<mosaic_0001>
module attributes {stable_mosaic.version = 11 : i64} {
  func.func @align_kernel(%arg0: memref<8x8x32xf32, #tpu.memory_space<vmem>>, %arg1: memref<8x8xf32, #tpu.memory_space<vmem>>, %arg2: memref<8xi32, #tpu.memory_space<smem>>, %arg3: memref<32x128xbf16, #tpu.memory_space<vmem>>, %arg4: memref<256x128xf32, #tpu.memory_space<any>>, %arg5: memref<128x256xbf16, #tpu.memory_space<vmem>>, %arg6: memref<1x384xi32, #tpu.memory_space<vmem>>, %arg7: memref<8x384xf32, #tpu.memory_space<vmem>>, %arg8: memref<8x128xi32, #tpu.memory_space<vmem>>, %arg9: memref<8x128xf32, #tpu.memory_space<vmem>>, %arg10: memref<8x!tpu.dma_semaphore, #tpu.memory_space<semaphore_mem>>) attributes {dimension_semantics = [], scalar_prefetch = 0 : i64, scratch_operands = 2 : i64, tpu.core_type = #tpu.core_type<tc>} {
    %c0 = arith.constant 0 : index
    %0 = memref.load %arg2[%c0] : memref<8xi32, #tpu.memory_space<smem>>
    %c0_i32 = arith.constant 0 : i32
    %c0_i32_0 = arith.constant 0 : i32
    %c0_i32_1 = arith.constant 0 : i32
    %1 = tpu.memref_slice %arg4[%0, %c0_i32_1] : memref<256x128xf32, #tpu.memory_space<any>> -> memref<1x128xf32, #tpu.memory_space<any>>
    %2 = tpu.memref_squeeze %1 : memref<1x128xf32, #tpu.memory_space<any>> -> memref<128xf32, #tpu.memory_space<any>>
    %c0_i32_2 = arith.constant 0 : i32
    %3 = tpu.memref_slice %arg9[%c0_i32, %c0_i32_2] : memref<8x128xf32, #tpu.memory_space<vmem>> -> memref<1x128xf32, #tpu.memory_space<vmem>>
    %4 = tpu.memref_squeeze %3 : memref<1x128xf32, #tpu.memory_space<vmem>> -> memref<128xf32, #tpu.memory_space<vmem>>
    %5 = tpu.memref_slice %arg10[%c0_i32_0] : memref<8x!tpu.dma_semaphore, #tpu.memory_space<semaphore_mem>> -> memref<1x!tpu.dma_semaphore, #tpu.memory_space<semaphore_mem>>
    %6 = tpu.memref_squeeze %5 : memref<1x!tpu.dma_semaphore, #tpu.memory_space<semaphore_mem>> -> memref<!tpu.dma_semaphore, #tpu.memory_space<semaphore_mem>>
    tpu.enqueue_dma source(%2 : memref<128xf32, #tpu.memory_space<any>>) target(%4 : memref<128xf32, #tpu.memory_space<vmem>>) target_semaphore(%6 : memref<!tpu.dma_semaphore, #tpu.memory_space<semaphore_mem>>)
    %c1 = arith.constant 1 : index
    %7 = memref.load %arg2[%c1] : memref<8xi32, #tpu.memory_space<smem>>
    %c1_i32 = arith.constant 1 : i32
    %c1_i32_3 = arith.constant 1 : i32
    %c0_i32_4 = arith.constant 0 : i32
    %8 = tpu.memref_slice %arg4[%7, %c0_i32_4] : memref<256x128xf32, #tpu.memory_space<any>> -> memref<1x128xf32, #tpu.memory_space<any>>
    %9 = tpu.memref_squeeze %8 : memref<1x128xf32, #tpu.memory_space<any>> -> memref<128xf32, #tpu.memory_space<any>>
    %c0_i32_5 = arith.constant 0 : i32
    %10 = tpu.memref_slice %arg9[%c1_i32, %c0_i32_5] : memref<8x128xf32, #tpu.memory_space<vmem>> -> memref<1x128xf32, #tpu.memory_space<vmem>>
    %11 = tpu.memref_squeeze %10 : memref<1x128xf32, #tpu.memory_space<vmem>> -> memref<128xf32, #tpu.memory_space<vmem>>
    %12 = tpu.memref_slice %arg10[%c1_i32_3] : memref<8x!tpu.dma_semaphore, #tpu.memory_space<semaphore_mem>> -> memref<1x!tpu.dma_semaphore, #tpu.memory_space<semaphore_mem>>
    %13 = tpu.memref_squeeze %12 : memref<1x!tpu.dma_semaphore, #tpu.memory_space<semaphore_mem>> -> memref<!tpu.dma_semaphore, #tpu.memory_space<semaphore_mem>>
    tpu.enqueue_dma source(%9 : memref<128xf32, #tpu.memory_space<any>>) target(%11 : memref<128xf32, #tpu.memory_space<vmem>>) target_semaphore(%13 : memref<!tpu.dma_semaphore, #tpu.memory_space<semaphore_mem>>)
    %c2 = arith.constant 2 : index
    %14 = memref.load %arg2[%c2] : memref<8xi32, #tpu.memory_space<smem>>
    %c2_i32 = arith.constant 2 : i32
    %c2_i32_6 = arith.constant 2 : i32
    %c0_i32_7 = arith.constant 0 : i32
    %15 = tpu.memref_slice %arg4[%14, %c0_i32_7] : memref<256x128xf32, #tpu.memory_space<any>> -> memref<1x128xf32, #tpu.memory_space<any>>
    %16 = tpu.memref_squeeze %15 : memref<1x128xf32, #tpu.memory_space<any>> -> memref<128xf32, #tpu.memory_space<any>>
    %c0_i32_8 = arith.constant 0 : i32
    %17 = tpu.memref_slice %arg9[%c2_i32, %c0_i32_8] : memref<8x128xf32, #tpu.memory_space<vmem>> -> memref<1x128xf32, #tpu.memory_space<vmem>>
    %18 = tpu.memref_squeeze %17 : memref<1x128xf32, #tpu.memory_space<vmem>> -> memref<128xf32, #tpu.memory_space<vmem>>
    %19 = tpu.memref_slice %arg10[%c2_i32_6] : memref<8x!tpu.dma_semaphore, #tpu.memory_space<semaphore_mem>> -> memref<1x!tpu.dma_semaphore, #tpu.memory_space<semaphore_mem>>
    %20 = tpu.memref_squeeze %19 : memref<1x!tpu.dma_semaphore, #tpu.memory_space<semaphore_mem>> -> memref<!tpu.dma_semaphore, #tpu.memory_space<semaphore_mem>>
    tpu.enqueue_dma source(%16 : memref<128xf32, #tpu.memory_space<any>>) target(%18 : memref<128xf32, #tpu.memory_space<vmem>>) target_semaphore(%20 : memref<!tpu.dma_semaphore, #tpu.memory_space<semaphore_mem>>)
    %c3 = arith.constant 3 : index
    %21 = memref.load %arg2[%c3] : memref<8xi32, #tpu.memory_space<smem>>
    %c3_i32 = arith.constant 3 : i32
    %c3_i32_9 = arith.constant 3 : i32
    %c0_i32_10 = arith.constant 0 : i32
    %22 = tpu.memref_slice %arg4[%21, %c0_i32_10] : memref<256x128xf32, #tpu.memory_space<any>> -> memref<1x128xf32, #tpu.memory_space<any>>
    %23 = tpu.memref_squeeze %22 : memref<1x128xf32, #tpu.memory_space<any>> -> memref<128xf32, #tpu.memory_space<any>>
    %c0_i32_11 = arith.constant 0 : i32
    %24 = tpu.memref_slice %arg9[%c3_i32, %c0_i32_11] : memref<8x128xf32, #tpu.memory_space<vmem>> -> memref<1x128xf32, #tpu.memory_space<vmem>>
    %25 = tpu.memref_squeeze %24 : memref<1x128xf32, #tpu.memory_space<vmem>> -> memref<128xf32, #tpu.memory_space<vmem>>
    %26 = tpu.memref_slice %arg10[%c3_i32_9] : memref<8x!tpu.dma_semaphore, #tpu.memory_space<semaphore_mem>> -> memref<1x!tpu.dma_semaphore, #tpu.memory_space<semaphore_mem>>
    %27 = tpu.memref_squeeze %26 : memref<1x!tpu.dma_semaphore, #tpu.memory_space<semaphore_mem>> -> memref<!tpu.dma_semaphore, #tpu.memory_space<semaphore_mem>>
    tpu.enqueue_dma source(%23 : memref<128xf32, #tpu.memory_space<any>>) target(%25 : memref<128xf32, #tpu.memory_space<vmem>>) target_semaphore(%27 : memref<!tpu.dma_semaphore, #tpu.memory_space<semaphore_mem>>)
    %c4 = arith.constant 4 : index
    %28 = memref.load %arg2[%c4] : memref<8xi32, #tpu.memory_space<smem>>
    %c4_i32 = arith.constant 4 : i32
    %c4_i32_12 = arith.constant 4 : i32
    %c0_i32_13 = arith.constant 0 : i32
    %29 = tpu.memref_slice %arg4[%28, %c0_i32_13] : memref<256x128xf32, #tpu.memory_space<any>> -> memref<1x128xf32, #tpu.memory_space<any>>
    %30 = tpu.memref_squeeze %29 : memref<1x128xf32, #tpu.memory_space<any>> -> memref<128xf32, #tpu.memory_space<any>>
    %c0_i32_14 = arith.constant 0 : i32
    %31 = tpu.memref_slice %arg9[%c4_i32, %c0_i32_14] : memref<8x128xf32, #tpu.memory_space<vmem>> -> memref<1x128xf32, #tpu.memory_space<vmem>>
    %32 = tpu.memref_squeeze %31 : memref<1x128xf32, #tpu.memory_space<vmem>> -> memref<128xf32, #tpu.memory_space<vmem>>
    %33 = tpu.memref_slice %arg10[%c4_i32_12] : memref<8x!tpu.dma_semaphore, #tpu.memory_space<semaphore_mem>> -> memref<1x!tpu.dma_semaphore, #tpu.memory_space<semaphore_mem>>
    %34 = tpu.memref_squeeze %33 : memref<1x!tpu.dma_semaphore, #tpu.memory_space<semaphore_mem>> -> memref<!tpu.dma_semaphore, #tpu.memory_space<semaphore_mem>>
    tpu.enqueue_dma source(%30 : memref<128xf32, #tpu.memory_space<any>>) target(%32 : memref<128xf32, #tpu.memory_space<vmem>>) target_semaphore(%34 : memref<!tpu.dma_semaphore, #tpu.memory_space<semaphore_mem>>)
    %c5 = arith.constant 5 : index
    %35 = memref.load %arg2[%c5] : memref<8xi32, #tpu.memory_space<smem>>
    %c5_i32 = arith.constant 5 : i32
    %c5_i32_15 = arith.constant 5 : i32
    %c0_i32_16 = arith.constant 0 : i32
    %36 = tpu.memref_slice %arg4[%35, %c0_i32_16] : memref<256x128xf32, #tpu.memory_space<any>> -> memref<1x128xf32, #tpu.memory_space<any>>
    %37 = tpu.memref_squeeze %36 : memref<1x128xf32, #tpu.memory_space<any>> -> memref<128xf32, #tpu.memory_space<any>>
    %c0_i32_17 = arith.constant 0 : i32
    %38 = tpu.memref_slice %arg9[%c5_i32, %c0_i32_17] : memref<8x128xf32, #tpu.memory_space<vmem>> -> memref<1x128xf32, #tpu.memory_space<vmem>>
    %39 = tpu.memref_squeeze %38 : memref<1x128xf32, #tpu.memory_space<vmem>> -> memref<128xf32, #tpu.memory_space<vmem>>
    %40 = tpu.memref_slice %arg10[%c5_i32_15] : memref<8x!tpu.dma_semaphore, #tpu.memory_space<semaphore_mem>> -> memref<1x!tpu.dma_semaphore, #tpu.memory_space<semaphore_mem>>
    %41 = tpu.memref_squeeze %40 : memref<1x!tpu.dma_semaphore, #tpu.memory_space<semaphore_mem>> -> memref<!tpu.dma_semaphore, #tpu.memory_space<semaphore_mem>>
    tpu.enqueue_dma source(%37 : memref<128xf32, #tpu.memory_space<any>>) target(%39 : memref<128xf32, #tpu.memory_space<vmem>>) target_semaphore(%41 : memref<!tpu.dma_semaphore, #tpu.memory_space<semaphore_mem>>)
    %c6 = arith.constant 6 : index
    %42 = memref.load %arg2[%c6] : memref<8xi32, #tpu.memory_space<smem>>
    %c6_i32 = arith.constant 6 : i32
    %c6_i32_18 = arith.constant 6 : i32
    %c0_i32_19 = arith.constant 0 : i32
    %43 = tpu.memref_slice %arg4[%42, %c0_i32_19] : memref<256x128xf32, #tpu.memory_space<any>> -> memref<1x128xf32, #tpu.memory_space<any>>
    %44 = tpu.memref_squeeze %43 : memref<1x128xf32, #tpu.memory_space<any>> -> memref<128xf32, #tpu.memory_space<any>>
    %c0_i32_20 = arith.constant 0 : i32
    %45 = tpu.memref_slice %arg9[%c6_i32, %c0_i32_20] : memref<8x128xf32, #tpu.memory_space<vmem>> -> memref<1x128xf32, #tpu.memory_space<vmem>>
    %46 = tpu.memref_squeeze %45 : memref<1x128xf32, #tpu.memory_space<vmem>> -> memref<128xf32, #tpu.memory_space<vmem>>
    %47 = tpu.memref_slice %arg10[%c6_i32_18] : memref<8x!tpu.dma_semaphore, #tpu.memory_space<semaphore_mem>> -> memref<1x!tpu.dma_semaphore, #tpu.memory_space<semaphore_mem>>
    %48 = tpu.memref_squeeze %47 : memref<1x!tpu.dma_semaphore, #tpu.memory_space<semaphore_mem>> -> memref<!tpu.dma_semaphore, #tpu.memory_space<semaphore_mem>>
    tpu.enqueue_dma source(%44 : memref<128xf32, #tpu.memory_space<any>>) target(%46 : memref<128xf32, #tpu.memory_space<vmem>>) target_semaphore(%48 : memref<!tpu.dma_semaphore, #tpu.memory_space<semaphore_mem>>)
    %c7 = arith.constant 7 : index
    %49 = memref.load %arg2[%c7] : memref<8xi32, #tpu.memory_space<smem>>
    %c7_i32 = arith.constant 7 : i32
    %c7_i32_21 = arith.constant 7 : i32
    %c0_i32_22 = arith.constant 0 : i32
    %50 = tpu.memref_slice %arg4[%49, %c0_i32_22] : memref<256x128xf32, #tpu.memory_space<any>> -> memref<1x128xf32, #tpu.memory_space<any>>
    %51 = tpu.memref_squeeze %50 : memref<1x128xf32, #tpu.memory_space<any>> -> memref<128xf32, #tpu.memory_space<any>>
    %c0_i32_23 = arith.constant 0 : i32
    %52 = tpu.memref_slice %arg9[%c7_i32, %c0_i32_23] : memref<8x128xf32, #tpu.memory_space<vmem>> -> memref<1x128xf32, #tpu.memory_space<vmem>>
    %53 = tpu.memref_squeeze %52 : memref<1x128xf32, #tpu.memory_space<vmem>> -> memref<128xf32, #tpu.memory_space<vmem>>
    %54 = tpu.memref_slice %arg10[%c7_i32_21] : memref<8x!tpu.dma_semaphore, #tpu.memory_space<semaphore_mem>> -> memref<1x!tpu.dma_semaphore, #tpu.memory_space<semaphore_mem>>
    %55 = tpu.memref_squeeze %54 : memref<1x!tpu.dma_semaphore, #tpu.memory_space<semaphore_mem>> -> memref<!tpu.dma_semaphore, #tpu.memory_space<semaphore_mem>>
    tpu.enqueue_dma source(%51 : memref<128xf32, #tpu.memory_space<any>>) target(%53 : memref<128xf32, #tpu.memory_space<vmem>>) target_semaphore(%55 : memref<!tpu.dma_semaphore, #tpu.memory_space<semaphore_mem>>)
    %c0_24 = arith.constant 0 : index
    %c0_25 = arith.constant 0 : index
    %c0_26 = arith.constant 0 : index
    %56 = vector.load %arg0[%c0_24, %c0_25, %c0_26] : memref<8x8x32xf32, #tpu.memory_space<vmem>>, vector<8x8x32xf32>
    %c0_27 = arith.constant 0 : index
    %c0_28 = arith.constant 0 : index
    %57 = vector.load %arg1[%c0_27, %c0_28] : memref<8x8xf32, #tpu.memory_space<vmem>>, vector<8x8xf32>
    %58 = vector.shape_cast %57 : vector<8x8xf32> to vector<8x8x1xf32>
    %59 = vector.broadcast %58 : vector<8x8x1xf32> to vector<8x8x32xf32>
    %60 = arith.mulf %56, %59 : vector<8x8x32xf32>
    %cst = arith.constant dense<0.000000e+00> : vector<8x32xf32>
    %61 = vector.multi_reduction <add>, %60, %cst [1] : vector<8x8x32xf32> to vector<8x32xf32>
    %cst_29 = arith.constant dense<0.000000e+00> : vector<8xf32>
    %62 = vector.multi_reduction <add>, %57, %cst_29 [1] : vector<8x8xf32> to vector<8xf32>
    %63 = vector.shape_cast %62 : vector<8xf32> to vector<8x1xf32>
    %cst_30 = arith.constant 1.000000e+00 : f32
    %64 = vector.broadcast %cst_30 : f32 to vector<8x1xf32>
    %65 = arith.maximumf %63, %64 : vector<8x1xf32>
    %66 = arith.truncf %61 : vector<8x32xf32> to vector<8x32xbf16>
    %c0_31 = arith.constant 0 : index
    %c0_32 = arith.constant 0 : index
    %67 = vector.load %arg3[%c0_31, %c0_32] : memref<32x128xbf16, #tpu.memory_space<vmem>>, vector<32x128xbf16>
    %cst_33 = arith.constant dense<0.000000e+00> : vector<8x128xf32>
    %68 = tpu.matmul %66, %67, %cst_33 {dimension_numbers = #tpu.dot_dimension_numbers<[1], [0], [0], [1], [0, 0, 1, 1], [], []>} : vector<8x32xbf16>, vector<32x128xbf16>, vector<8x128xf32> -> vector<8x128xf32>
    %69 = vector.broadcast %65 : vector<8x1xf32> to vector<8x128xf32>
    %70 = arith.divf %68, %69 : vector<8x128xf32>
    %c0_i32_34 = arith.constant 0 : i32
    %c0_i32_35 = arith.constant 0 : i32
    %c0_i32_36 = arith.constant 0 : i32
    %71 = tpu.memref_slice %arg4[%0, %c0_i32_36] : memref<256x128xf32, #tpu.memory_space<any>> -> memref<1x128xf32, #tpu.memory_space<any>>
    %72 = tpu.memref_squeeze %71 : memref<1x128xf32, #tpu.memory_space<any>> -> memref<128xf32, #tpu.memory_space<any>>
    %c0_i32_37 = arith.constant 0 : i32
    %73 = tpu.memref_slice %arg9[%c0_i32_34, %c0_i32_37] : memref<8x128xf32, #tpu.memory_space<vmem>> -> memref<1x128xf32, #tpu.memory_space<vmem>>
    %74 = tpu.memref_squeeze %73 : memref<1x128xf32, #tpu.memory_space<vmem>> -> memref<128xf32, #tpu.memory_space<vmem>>
    %75 = tpu.memref_slice %arg10[%c0_i32_35] : memref<8x!tpu.dma_semaphore, #tpu.memory_space<semaphore_mem>> -> memref<1x!tpu.dma_semaphore, #tpu.memory_space<semaphore_mem>>
    %76 = tpu.memref_squeeze %75 : memref<1x!tpu.dma_semaphore, #tpu.memory_space<semaphore_mem>> -> memref<!tpu.dma_semaphore, #tpu.memory_space<semaphore_mem>>
    tpu.wait_dma2 semaphore(%76 : memref<!tpu.dma_semaphore, #tpu.memory_space<semaphore_mem>>) src(%72 : memref<128xf32, #tpu.memory_space<any>>) dst(%74 : memref<128xf32, #tpu.memory_space<vmem>>)
    %c1_i32_38 = arith.constant 1 : i32
    %c1_i32_39 = arith.constant 1 : i32
    %c0_i32_40 = arith.constant 0 : i32
    %77 = tpu.memref_slice %arg4[%7, %c0_i32_40] : memref<256x128xf32, #tpu.memory_space<any>> -> memref<1x128xf32, #tpu.memory_space<any>>
    %78 = tpu.memref_squeeze %77 : memref<1x128xf32, #tpu.memory_space<any>> -> memref<128xf32, #tpu.memory_space<any>>
    %c0_i32_41 = arith.constant 0 : i32
    %79 = tpu.memref_slice %arg9[%c1_i32_38, %c0_i32_41] : memref<8x128xf32, #tpu.memory_space<vmem>> -> memref<1x128xf32, #tpu.memory_space<vmem>>
    %80 = tpu.memref_squeeze %79 : memref<1x128xf32, #tpu.memory_space<vmem>> -> memref<128xf32, #tpu.memory_space<vmem>>
    %81 = tpu.memref_slice %arg10[%c1_i32_39] : memref<8x!tpu.dma_semaphore, #tpu.memory_space<semaphore_mem>> -> memref<1x!tpu.dma_semaphore, #tpu.memory_space<semaphore_mem>>
    %82 = tpu.memref_squeeze %81 : memref<1x!tpu.dma_semaphore, #tpu.memory_space<semaphore_mem>> -> memref<!tpu.dma_semaphore, #tpu.memory_space<semaphore_mem>>
    tpu.wait_dma2 semaphore(%82 : memref<!tpu.dma_semaphore, #tpu.memory_space<semaphore_mem>>) src(%78 : memref<128xf32, #tpu.memory_space<any>>) dst(%80 : memref<128xf32, #tpu.memory_space<vmem>>)
    %c2_i32_42 = arith.constant 2 : i32
    %c2_i32_43 = arith.constant 2 : i32
    %c0_i32_44 = arith.constant 0 : i32
    %83 = tpu.memref_slice %arg4[%14, %c0_i32_44] : memref<256x128xf32, #tpu.memory_space<any>> -> memref<1x128xf32, #tpu.memory_space<any>>
    %84 = tpu.memref_squeeze %83 : memref<1x128xf32, #tpu.memory_space<any>> -> memref<128xf32, #tpu.memory_space<any>>
    %c0_i32_45 = arith.constant 0 : i32
    %85 = tpu.memref_slice %arg9[%c2_i32_42, %c0_i32_45] : memref<8x128xf32, #tpu.memory_space<vmem>> -> memref<1x128xf32, #tpu.memory_space<vmem>>
    %86 = tpu.memref_squeeze %85 : memref<1x128xf32, #tpu.memory_space<vmem>> -> memref<128xf32, #tpu.memory_space<vmem>>
    %87 = tpu.memref_slice %arg10[%c2_i32_43] : memref<8x!tpu.dma_semaphore, #tpu.memory_space<semaphore_mem>> -> memref<1x!tpu.dma_semaphore, #tpu.memory_space<semaphore_mem>>
    %88 = tpu.memref_squeeze %87 : memref<1x!tpu.dma_semaphore, #tpu.memory_space<semaphore_mem>> -> memref<!tpu.dma_semaphore, #tpu.memory_space<semaphore_mem>>
    tpu.wait_dma2 semaphore(%88 : memref<!tpu.dma_semaphore, #tpu.memory_space<semaphore_mem>>) src(%84 : memref<128xf32, #tpu.memory_space<any>>) dst(%86 : memref<128xf32, #tpu.memory_space<vmem>>)
    %c3_i32_46 = arith.constant 3 : i32
    %c3_i32_47 = arith.constant 3 : i32
    %c0_i32_48 = arith.constant 0 : i32
    %89 = tpu.memref_slice %arg4[%21, %c0_i32_48] : memref<256x128xf32, #tpu.memory_space<any>> -> memref<1x128xf32, #tpu.memory_space<any>>
    %90 = tpu.memref_squeeze %89 : memref<1x128xf32, #tpu.memory_space<any>> -> memref<128xf32, #tpu.memory_space<any>>
    %c0_i32_49 = arith.constant 0 : i32
    %91 = tpu.memref_slice %arg9[%c3_i32_46, %c0_i32_49] : memref<8x128xf32, #tpu.memory_space<vmem>> -> memref<1x128xf32, #tpu.memory_space<vmem>>
    %92 = tpu.memref_squeeze %91 : memref<1x128xf32, #tpu.memory_space<vmem>> -> memref<128xf32, #tpu.memory_space<vmem>>
    %93 = tpu.memref_slice %arg10[%c3_i32_47] : memref<8x!tpu.dma_semaphore, #tpu.memory_space<semaphore_mem>> -> memref<1x!tpu.dma_semaphore, #tpu.memory_space<semaphore_mem>>
    %94 = tpu.memref_squeeze %93 : memref<1x!tpu.dma_semaphore, #tpu.memory_space<semaphore_mem>> -> memref<!tpu.dma_semaphore, #tpu.memory_space<semaphore_mem>>
    tpu.wait_dma2 semaphore(%94 : memref<!tpu.dma_semaphore, #tpu.memory_space<semaphore_mem>>) src(%90 : memref<128xf32, #tpu.memory_space<any>>) dst(%92 : memref<128xf32, #tpu.memory_space<vmem>>)
    %c4_i32_50 = arith.constant 4 : i32
    %c4_i32_51 = arith.constant 4 : i32
    %c0_i32_52 = arith.constant 0 : i32
    %95 = tpu.memref_slice %arg4[%28, %c0_i32_52] : memref<256x128xf32, #tpu.memory_space<any>> -> memref<1x128xf32, #tpu.memory_space<any>>
    %96 = tpu.memref_squeeze %95 : memref<1x128xf32, #tpu.memory_space<any>> -> memref<128xf32, #tpu.memory_space<any>>
    %c0_i32_53 = arith.constant 0 : i32
    %97 = tpu.memref_slice %arg9[%c4_i32_50, %c0_i32_53] : memref<8x128xf32, #tpu.memory_space<vmem>> -> memref<1x128xf32, #tpu.memory_space<vmem>>
    %98 = tpu.memref_squeeze %97 : memref<1x128xf32, #tpu.memory_space<vmem>> -> memref<128xf32, #tpu.memory_space<vmem>>
    %99 = tpu.memref_slice %arg10[%c4_i32_51] : memref<8x!tpu.dma_semaphore, #tpu.memory_space<semaphore_mem>> -> memref<1x!tpu.dma_semaphore, #tpu.memory_space<semaphore_mem>>
    %100 = tpu.memref_squeeze %99 : memref<1x!tpu.dma_semaphore, #tpu.memory_space<semaphore_mem>> -> memref<!tpu.dma_semaphore, #tpu.memory_space<semaphore_mem>>
    tpu.wait_dma2 semaphore(%100 : memref<!tpu.dma_semaphore, #tpu.memory_space<semaphore_mem>>) src(%96 : memref<128xf32, #tpu.memory_space<any>>) dst(%98 : memref<128xf32, #tpu.memory_space<vmem>>)
    %c5_i32_54 = arith.constant 5 : i32
    %c5_i32_55 = arith.constant 5 : i32
    %c0_i32_56 = arith.constant 0 : i32
    %101 = tpu.memref_slice %arg4[%35, %c0_i32_56] : memref<256x128xf32, #tpu.memory_space<any>> -> memref<1x128xf32, #tpu.memory_space<any>>
    %102 = tpu.memref_squeeze %101 : memref<1x128xf32, #tpu.memory_space<any>> -> memref<128xf32, #tpu.memory_space<any>>
    %c0_i32_57 = arith.constant 0 : i32
    %103 = tpu.memref_slice %arg9[%c5_i32_54, %c0_i32_57] : memref<8x128xf32, #tpu.memory_space<vmem>> -> memref<1x128xf32, #tpu.memory_space<vmem>>
    %104 = tpu.memref_squeeze %103 : memref<1x128xf32, #tpu.memory_space<vmem>> -> memref<128xf32, #tpu.memory_space<vmem>>
    %105 = tpu.memref_slice %arg10[%c5_i32_55] : memref<8x!tpu.dma_semaphore, #tpu.memory_space<semaphore_mem>> -> memref<1x!tpu.dma_semaphore, #tpu.memory_space<semaphore_mem>>
    %106 = tpu.memref_squeeze %105 : memref<1x!tpu.dma_semaphore, #tpu.memory_space<semaphore_mem>> -> memref<!tpu.dma_semaphore, #tpu.memory_space<semaphore_mem>>
    tpu.wait_dma2 semaphore(%106 : memref<!tpu.dma_semaphore, #tpu.memory_space<semaphore_mem>>) src(%102 : memref<128xf32, #tpu.memory_space<any>>) dst(%104 : memref<128xf32, #tpu.memory_space<vmem>>)
    %c6_i32_58 = arith.constant 6 : i32
    %c6_i32_59 = arith.constant 6 : i32
    %c0_i32_60 = arith.constant 0 : i32
    %107 = tpu.memref_slice %arg4[%42, %c0_i32_60] : memref<256x128xf32, #tpu.memory_space<any>> -> memref<1x128xf32, #tpu.memory_space<any>>
    %108 = tpu.memref_squeeze %107 : memref<1x128xf32, #tpu.memory_space<any>> -> memref<128xf32, #tpu.memory_space<any>>
    %c0_i32_61 = arith.constant 0 : i32
    %109 = tpu.memref_slice %arg9[%c6_i32_58, %c0_i32_61] : memref<8x128xf32, #tpu.memory_space<vmem>> -> memref<1x128xf32, #tpu.memory_space<vmem>>
    %110 = tpu.memref_squeeze %109 : memref<1x128xf32, #tpu.memory_space<vmem>> -> memref<128xf32, #tpu.memory_space<vmem>>
    %111 = tpu.memref_slice %arg10[%c6_i32_59] : memref<8x!tpu.dma_semaphore, #tpu.memory_space<semaphore_mem>> -> memref<1x!tpu.dma_semaphore, #tpu.memory_space<semaphore_mem>>
    %112 = tpu.memref_squeeze %111 : memref<1x!tpu.dma_semaphore, #tpu.memory_space<semaphore_mem>> -> memref<!tpu.dma_semaphore, #tpu.memory_space<semaphore_mem>>
    tpu.wait_dma2 semaphore(%112 : memref<!tpu.dma_semaphore, #tpu.memory_space<semaphore_mem>>) src(%108 : memref<128xf32, #tpu.memory_space<any>>) dst(%110 : memref<128xf32, #tpu.memory_space<vmem>>)
    %c7_i32_62 = arith.constant 7 : i32
    %c7_i32_63 = arith.constant 7 : i32
    %c0_i32_64 = arith.constant 0 : i32
    %113 = tpu.memref_slice %arg4[%49, %c0_i32_64] : memref<256x128xf32, #tpu.memory_space<any>> -> memref<1x128xf32, #tpu.memory_space<any>>
    %114 = tpu.memref_squeeze %113 : memref<1x128xf32, #tpu.memory_space<any>> -> memref<128xf32, #tpu.memory_space<any>>
    %c0_i32_65 = arith.constant 0 : i32
    %115 = tpu.memref_slice %arg9[%c7_i32_62, %c0_i32_65] : memref<8x128xf32, #tpu.memory_space<vmem>> -> memref<1x128xf32, #tpu.memory_space<vmem>>
    %116 = tpu.memref_squeeze %115 : memref<1x128xf32, #tpu.memory_space<vmem>> -> memref<128xf32, #tpu.memory_space<vmem>>
    %117 = tpu.memref_slice %arg10[%c7_i32_63] : memref<8x!tpu.dma_semaphore, #tpu.memory_space<semaphore_mem>> -> memref<1x!tpu.dma_semaphore, #tpu.memory_space<semaphore_mem>>
    %118 = tpu.memref_squeeze %117 : memref<1x!tpu.dma_semaphore, #tpu.memory_space<semaphore_mem>> -> memref<!tpu.dma_semaphore, #tpu.memory_space<semaphore_mem>>
    tpu.wait_dma2 semaphore(%118 : memref<!tpu.dma_semaphore, #tpu.memory_space<semaphore_mem>>) src(%114 : memref<128xf32, #tpu.memory_space<any>>) dst(%116 : memref<128xf32, #tpu.memory_space<vmem>>)
    %c0_66 = arith.constant 0 : index
    %c0_67 = arith.constant 0 : index
    %119 = vector.load %arg9[%c0_66, %c0_67] : memref<8x128xf32, #tpu.memory_space<vmem>>, vector<8x128xf32>
    %120 = arith.addf %70, %119 : vector<8x128xf32>
    %121 = math.tanh %120 : vector<8x128xf32>
    %122 = arith.truncf %121 : vector<8x128xf32> to vector<8x128xbf16>
    %c0_68 = arith.constant 0 : index
    %c0_69 = arith.constant 0 : index
    %123 = vector.load %arg5[%c0_68, %c0_69] : memref<128x256xbf16, #tpu.memory_space<vmem>>, vector<128x256xbf16>
    %cst_70 = arith.constant dense<0.000000e+00> : vector<8x256xf32>
    %124 = tpu.matmul %122, %123, %cst_70 {dimension_numbers = #tpu.dot_dimension_numbers<[1], [0], [0], [1], [0, 0, 1, 1], [], []>} : vector<8x128xbf16>, vector<128x256xbf16>, vector<8x256xf32> -> vector<8x256xf32>
    %125 = tpu.iota {dimensions = array<i32: 1>} : vector<8x256xi32>
    %cst_71 = arith.constant dense<0xFF800000> : vector<8xf32>
    %126 = vector.multi_reduction <maximumf>, %124, %cst_71 [1] : vector<8x256xf32> to vector<8xf32>
    %127 = vector.shape_cast %126 : vector<8xf32> to vector<8x1xf32>
    %128 = vector.broadcast %127 : vector<8x1xf32> to vector<8x256xf32>
    %129 = arith.cmpf oeq, %124, %128 : vector<8x256xf32>
    %c256_i32 = arith.constant 256 : i32
    %130 = vector.broadcast %c256_i32 : i32 to vector<8x256xi32>
    %131 = arith.select %129, %125, %130 : vector<8x256xi1>, vector<8x256xi32>
    %cst_72 = arith.constant dense<2147483647> : vector<8xi32>
    %132 = vector.multi_reduction <minsi>, %131, %cst_72 [1] : vector<8x256xi32> to vector<8xi32>
    %133 = vector.shape_cast %132 : vector<8xi32> to vector<8x1xi32>
    %134 = vector.broadcast %133 : vector<8x1xi32> to vector<8x256xi32>
    %135 = arith.cmpi eq, %125, %134 : vector<8x256xi32>
    %cst_73 = arith.constant -3.40282347E+38 : f32
    %136 = vector.broadcast %cst_73 : f32 to vector<8x256xf32>
    %137 = arith.select %135, %136, %124 : vector<8x256xi1>, vector<8x256xf32>
    %cst_74 = arith.constant dense<0xFF800000> : vector<8xf32>
    %138 = vector.multi_reduction <maximumf>, %137, %cst_74 [1] : vector<8x256xf32> to vector<8xf32>
    %139 = vector.shape_cast %138 : vector<8xf32> to vector<8x1xf32>
    %140 = vector.broadcast %139 : vector<8x1xf32> to vector<8x256xf32>
    %141 = arith.cmpf oeq, %137, %140 : vector<8x256xf32>
    %c256_i32_75 = arith.constant 256 : i32
    %142 = vector.broadcast %c256_i32_75 : i32 to vector<8x256xi32>
    %143 = arith.select %141, %125, %142 : vector<8x256xi1>, vector<8x256xi32>
    %cst_76 = arith.constant dense<2147483647> : vector<8xi32>
    %144 = vector.multi_reduction <minsi>, %143, %cst_76 [1] : vector<8x256xi32> to vector<8xi32>
    %145 = vector.shape_cast %144 : vector<8xi32> to vector<8x1xi32>
    %146 = vector.broadcast %145 : vector<8x1xi32> to vector<8x256xi32>
    %147 = arith.cmpi eq, %125, %146 : vector<8x256xi32>
    %cst_77 = arith.constant -3.40282347E+38 : f32
    %148 = vector.broadcast %cst_77 : f32 to vector<8x256xf32>
    %149 = arith.select %147, %148, %137 : vector<8x256xi1>, vector<8x256xf32>
    %cst_78 = arith.constant dense<0xFF800000> : vector<8xf32>
    %150 = vector.multi_reduction <maximumf>, %149, %cst_78 [1] : vector<8x256xf32> to vector<8xf32>
    %151 = vector.shape_cast %150 : vector<8xf32> to vector<8x1xf32>
    %152 = vector.broadcast %151 : vector<8x1xf32> to vector<8x256xf32>
    %153 = arith.cmpf oeq, %149, %152 : vector<8x256xf32>
    %c256_i32_79 = arith.constant 256 : i32
    %154 = vector.broadcast %c256_i32_79 : i32 to vector<8x256xi32>
    %155 = arith.select %153, %125, %154 : vector<8x256xi1>, vector<8x256xi32>
    %cst_80 = arith.constant dense<2147483647> : vector<8xi32>
    %156 = vector.multi_reduction <minsi>, %155, %cst_80 [1] : vector<8x256xi32> to vector<8xi32>
    %157 = vector.shape_cast %156 : vector<8xi32> to vector<8x1xi32>
    %158 = vector.broadcast %157 : vector<8x1xi32> to vector<8x256xi32>
    %159 = arith.cmpi eq, %125, %158 : vector<8x256xi32>
    %cst_81 = arith.constant -3.40282347E+38 : f32
    %160 = vector.broadcast %cst_81 : f32 to vector<8x256xf32>
    %161 = arith.select %159, %160, %149 : vector<8x256xi1>, vector<8x256xf32>
    %cst_82 = arith.constant dense<0xFF800000> : vector<8xf32>
    %162 = vector.multi_reduction <maximumf>, %161, %cst_82 [1] : vector<8x256xf32> to vector<8xf32>
    %163 = vector.shape_cast %162 : vector<8xf32> to vector<8x1xf32>
    %164 = vector.broadcast %163 : vector<8x1xf32> to vector<8x256xf32>
    %165 = arith.cmpf oeq, %161, %164 : vector<8x256xf32>
    %c256_i32_83 = arith.constant 256 : i32
    %166 = vector.broadcast %c256_i32_83 : i32 to vector<8x256xi32>
    %167 = arith.select %165, %125, %166 : vector<8x256xi1>, vector<8x256xi32>
    %cst_84 = arith.constant dense<2147483647> : vector<8xi32>
    %168 = vector.multi_reduction <minsi>, %167, %cst_84 [1] : vector<8x256xi32> to vector<8xi32>
    %169 = vector.shape_cast %168 : vector<8xi32> to vector<8x1xi32>
    %170 = vector.broadcast %169 : vector<8x1xi32> to vector<8x256xi32>
    %171 = arith.cmpi eq, %125, %170 : vector<8x256xi32>
    %cst_85 = arith.constant -3.40282347E+38 : f32
    %172 = vector.broadcast %cst_85 : f32 to vector<8x256xf32>
    %173 = arith.select %171, %172, %161 : vector<8x256xi1>, vector<8x256xf32>
    %cst_86 = arith.constant dense<0xFF800000> : vector<8xf32>
    %174 = vector.multi_reduction <maximumf>, %173, %cst_86 [1] : vector<8x256xf32> to vector<8xf32>
    %175 = vector.shape_cast %174 : vector<8xf32> to vector<8x1xf32>
    %176 = vector.broadcast %175 : vector<8x1xf32> to vector<8x256xf32>
    %177 = arith.cmpf oeq, %173, %176 : vector<8x256xf32>
    %c256_i32_87 = arith.constant 256 : i32
    %178 = vector.broadcast %c256_i32_87 : i32 to vector<8x256xi32>
    %179 = arith.select %177, %125, %178 : vector<8x256xi1>, vector<8x256xi32>
    %cst_88 = arith.constant dense<2147483647> : vector<8xi32>
    %180 = vector.multi_reduction <minsi>, %179, %cst_88 [1] : vector<8x256xi32> to vector<8xi32>
    %181 = vector.shape_cast %180 : vector<8xi32> to vector<8x1xi32>
    %182 = arith.subf %127, %127 : vector<8x1xf32>
    %183 = math.exp %182 : vector<8x1xf32>
    %184 = arith.subf %139, %127 : vector<8x1xf32>
    %185 = math.exp %184 : vector<8x1xf32>
    %186 = arith.subf %151, %127 : vector<8x1xf32>
    %187 = math.exp %186 : vector<8x1xf32>
    %188 = arith.subf %163, %127 : vector<8x1xf32>
    %189 = math.exp %188 : vector<8x1xf32>
    %190 = arith.subf %175, %127 : vector<8x1xf32>
    %191 = math.exp %190 : vector<8x1xf32>
    %192 = arith.addf %183, %185 : vector<8x1xf32>
    %193 = arith.addf %192, %187 : vector<8x1xf32>
    %194 = arith.addf %193, %189 : vector<8x1xf32>
    %195 = arith.addf %194, %191 : vector<8x1xf32>
    %196 = tpu.reciprocal %195 : vector<8x1xf32> -> vector<8x1xf32>
    %197 = arith.mulf %183, %196 : vector<8x1xf32>
    %198 = arith.mulf %185, %196 : vector<8x1xf32>
    %199 = arith.mulf %187, %196 : vector<8x1xf32>
    %200 = arith.mulf %189, %196 : vector<8x1xf32>
    %201 = arith.mulf %191, %196 : vector<8x1xf32>
    %c0_89 = arith.constant 0 : index
    %c0_90 = arith.constant 0 : index
    %202 = vector.load %arg6[%c0_89, %c0_90] : memref<1x384xi32, #tpu.memory_space<vmem>>, vector<1x384xi32>
    %cst_91 = arith.constant 0.000000e+00 : f32
    %203 = vector.broadcast %cst_91 : f32 to vector<8x384xf32>
    %204 = vector.broadcast %202 : vector<1x384xi32> to vector<8x384xi32>
    %205 = vector.broadcast %133 : vector<8x1xi32> to vector<8x384xi32>
    %206 = arith.cmpi eq, %204, %205 : vector<8x384xi32>
    %cst_92 = arith.constant 0.000000e+00 : f32
    %207 = vector.shape_cast %197 : vector<8x1xf32> to vector<8x1xf32>
    %208 = vector.broadcast %207 : vector<8x1xf32> to vector<8x384xf32>
    %209 = vector.broadcast %cst_92 : f32 to vector<8x384xf32>
    %210 = arith.select %206, %208, %209 : vector<8x384xi1>, vector<8x384xf32>
    %211 = arith.addf %203, %210 : vector<8x384xf32>
    %212 = vector.broadcast %202 : vector<1x384xi32> to vector<8x384xi32>
    %213 = vector.broadcast %145 : vector<8x1xi32> to vector<8x384xi32>
    %214 = arith.cmpi eq, %212, %213 : vector<8x384xi32>
    %cst_93 = arith.constant 0.000000e+00 : f32
    %215 = vector.shape_cast %198 : vector<8x1xf32> to vector<8x1xf32>
    %216 = vector.broadcast %215 : vector<8x1xf32> to vector<8x384xf32>
    %217 = vector.broadcast %cst_93 : f32 to vector<8x384xf32>
    %218 = arith.select %214, %216, %217 : vector<8x384xi1>, vector<8x384xf32>
    %219 = arith.addf %211, %218 : vector<8x384xf32>
    %220 = vector.broadcast %202 : vector<1x384xi32> to vector<8x384xi32>
    %221 = vector.broadcast %157 : vector<8x1xi32> to vector<8x384xi32>
    %222 = arith.cmpi eq, %220, %221 : vector<8x384xi32>
    %cst_94 = arith.constant 0.000000e+00 : f32
    %223 = vector.shape_cast %199 : vector<8x1xf32> to vector<8x1xf32>
    %224 = vector.broadcast %223 : vector<8x1xf32> to vector<8x384xf32>
    %225 = vector.broadcast %cst_94 : f32 to vector<8x384xf32>
    %226 = arith.select %222, %224, %225 : vector<8x384xi1>, vector<8x384xf32>
    %227 = arith.addf %219, %226 : vector<8x384xf32>
    %228 = vector.broadcast %202 : vector<1x384xi32> to vector<8x384xi32>
    %229 = vector.broadcast %169 : vector<8x1xi32> to vector<8x384xi32>
    %230 = arith.cmpi eq, %228, %229 : vector<8x384xi32>
    %cst_95 = arith.constant 0.000000e+00 : f32
    %231 = vector.shape_cast %200 : vector<8x1xf32> to vector<8x1xf32>
    %232 = vector.broadcast %231 : vector<8x1xf32> to vector<8x384xf32>
    %233 = vector.broadcast %cst_95 : f32 to vector<8x384xf32>
    %234 = arith.select %230, %232, %233 : vector<8x384xi1>, vector<8x384xf32>
    %235 = arith.addf %227, %234 : vector<8x384xf32>
    %236 = vector.broadcast %202 : vector<1x384xi32> to vector<8x384xi32>
    %237 = vector.broadcast %181 : vector<8x1xi32> to vector<8x384xi32>
    %238 = arith.cmpi eq, %236, %237 : vector<8x384xi32>
    %cst_96 = arith.constant 0.000000e+00 : f32
    %239 = vector.shape_cast %201 : vector<8x1xf32> to vector<8x1xf32>
    %240 = vector.broadcast %239 : vector<8x1xf32> to vector<8x384xf32>
    %241 = vector.broadcast %cst_96 : f32 to vector<8x384xf32>
    %242 = arith.select %238, %240, %241 : vector<8x384xi1>, vector<8x384xf32>
    %243 = arith.addf %235, %242 : vector<8x384xf32>
    %c0_97 = arith.constant 0 : index
    %c0_98 = arith.constant 0 : index
    %244 = vector.load %arg7[%c0_97, %c0_98] : memref<8x384xf32, #tpu.memory_space<vmem>>, vector<8x384xf32>
    tpu.vector_store %arg7[%c0_97, %c0_98], %243 {strides = array<i32>} : memref<8x384xf32, #tpu.memory_space<vmem>>, vector<8x384xf32>,
    %245 = tpu.iota {dimensions = array<i32: 1>} : vector<8x384xi32>
    %cst_99 = arith.constant dense<0xFF800000> : vector<8xf32>
    %246 = vector.multi_reduction <maximumf>, %243, %cst_99 [1] : vector<8x384xf32> to vector<8xf32>
    %247 = vector.shape_cast %246 : vector<8xf32> to vector<8x1xf32>
    %248 = vector.broadcast %247 : vector<8x1xf32> to vector<8x384xf32>
    %249 = arith.cmpf oeq, %243, %248 : vector<8x384xf32>
    %c384_i32 = arith.constant 384 : i32
    %250 = vector.broadcast %c384_i32 : i32 to vector<8x384xi32>
    %251 = arith.select %249, %245, %250 : vector<8x384xi1>, vector<8x384xi32>
    %cst_100 = arith.constant dense<2147483647> : vector<8xi32>
    %252 = vector.multi_reduction <minsi>, %251, %cst_100 [1] : vector<8x384xi32> to vector<8xi32>
    %253 = vector.shape_cast %252 : vector<8xi32> to vector<8x1xi32>
    %254 = tpu.iota {dimensions = array<i32: 1>} : vector<8x128xi32>
    %c0_i32_101 = arith.constant 0 : i32
    %255 = vector.broadcast %c0_i32_101 : i32 to vector<8x128xi32>
    %256 = arith.cmpi eq, %254, %255 : vector<8x128xi32>
    %c0_i32_102 = arith.constant 0 : i32
    %257 = vector.shape_cast %133 : vector<8x1xi32> to vector<8x1xi32>
    %258 = vector.broadcast %257 : vector<8x1xi32> to vector<8x128xi32>
    %259 = vector.broadcast %c0_i32_102 : i32 to vector<8x128xi32>
    %260 = arith.select %256, %258, %259 : vector<8x128xi1>, vector<8x128xi32>
    %c1_i32_103 = arith.constant 1 : i32
    %261 = vector.broadcast %c1_i32_103 : i32 to vector<8x128xi32>
    %262 = arith.cmpi eq, %254, %261 : vector<8x128xi32>
    %c0_i32_104 = arith.constant 0 : i32
    %263 = vector.shape_cast %253 : vector<8x1xi32> to vector<8x1xi32>
    %264 = vector.broadcast %263 : vector<8x1xi32> to vector<8x128xi32>
    %265 = vector.broadcast %c0_i32_104 : i32 to vector<8x128xi32>
    %266 = arith.select %262, %264, %265 : vector<8x128xi1>, vector<8x128xi32>
    %267 = arith.addi %260, %266 : vector<8x128xi32>
    %c0_105 = arith.constant 0 : index
    %c0_106 = arith.constant 0 : index
    %268 = vector.load %arg8[%c0_105, %c0_106] : memref<8x128xi32, #tpu.memory_space<vmem>>, vector<8x128xi32>
    tpu.vector_store %arg8[%c0_105, %c0_106], %267 {strides = array<i32>} : memref<8x128xi32, #tpu.memory_space<vmem>>, vector<8x128xi32>,
    return
  }
}

</mosaic_0001>

<llo_original>
// kernel: align_forward.1
$region0: #{align_forward.1}
  #allocation0 [shape = 'u32[]', space=smem, size = 0x4, offset = 0x4, fixed_abs, tag = 'smem constant byte address 0x4 - core index']
  #allocation1 [shape = 'u32[144,128]{1,0:T(1,128)}', space=vmem, size = 0x12000, scoped, tag = 'internal scratch']
  #allocation2 [shape = 'f32[8,128]{1,0:T(8,128)}', space=vmem, size = 0x1000, scoped, tag = 'scratch operand']
  #allocation3 [shape = 's32[8]{0}', space=sflag, size = 0x20, scoped, tag = 'scratch operand']
  #allocation8 [shape = 's32[]', space=sflag, size = 0x4, offset = 0, fixed_abs, tag = 'sflag constant byte address 0x0 - dummy sync flag']
  #allocation9 [shape = 's32[]', space=sflag, size = 0x4, offset = 0, fixed_abs, tag = 'sflag constant byte address 0x0 - dummy sync flag']
  #allocation10 [shape = 'u32[]', space=smem, size = 0x4, offset = 0x44, fixed_abs, tag = 'smem constant byte address 0x44 - assertion arg 0']
  #allocation11 [shape = 'u32[]', space=smem, size = 0x4, offset = 0x48, fixed_abs, tag = 'smem constant byte address 0x48 - assertion arg 1']
  #allocation12 [shape = 's32[]', space=sflag, size = 0x4, offset = 0, fixed_abs, tag = 'sflag constant byte address 0x0 - dummy sync flag']
  #allocation13 [shape = 's32[]', space=sflag, size = 0x4, offset = 0, fixed_abs, tag = 'sflag constant byte address 0x0 - dummy sync flag']
  #allocation14 [shape = 's32[]', space=sflag, size = 0x4, offset = 0, fixed_abs, tag = 'sflag constant byte address 0x0 - dummy sync flag']
  #allocation15 [shape = 's32[]', space=sflag, size = 0x4, offset = 0, fixed_abs, tag = 'sflag constant byte address 0x0 - dummy sync flag']
  #allocation16 [shape = 's32[]', space=sflag, size = 0x4, offset = 0, fixed_abs, tag = 'sflag constant byte address 0x0 - dummy sync flag']
  #allocation17 [shape = 's32[]', space=sflag, size = 0x4, offset = 0, fixed_abs, tag = 'sflag constant byte address 0x0 - dummy sync flag']
  #allocation18 [shape = 's32[]', space=sflag, size = 0x4, offset = 0, fixed_abs, tag = 'sflag constant byte address 0x0 - dummy sync flag']
  #allocation19 [shape = 's32[]', space=sflag, size = 0x4, offset = 0, fixed_abs, tag = 'sflag constant byte address 0x0 - dummy sync flag']
  #allocation20 [shape = 's32[]', space=sflag, size = 0x4, offset = 0, fixed_abs, tag = 'sflag constant byte address 0x0 - dummy sync flag']
  #allocation21 [shape = 's32[]', space=sflag, size = 0x4, offset = 0, fixed_abs, tag = 'sflag constant byte address 0x0 - dummy sync flag']
  #allocation22 [shape = 's32[]', space=sflag, size = 0x4, offset = 0, fixed_abs, tag = 'sflag constant byte address 0x0 - dummy sync flag']
  #allocation23 [shape = 's32[]', space=sflag, size = 0x4, offset = 0, fixed_abs, tag = 'sflag constant byte address 0x0 - dummy sync flag']
  #allocation24 [shape = 's32[]', space=sflag, size = 0x4, offset = 0, fixed_abs, tag = 'sflag constant byte address 0x0 - dummy sync flag']
  #allocation25 [shape = 's32[]', space=sflag, size = 0x4, offset = 0, fixed_abs, tag = 'sflag constant byte address 0x0 - dummy sync flag']
  %s0 = inlined_call_operand.vmem [shape: f32[8,8,32], index: 0, kind: input, shape index: {}]
  %s1 = inlined_call_operand.vmem [shape: f32[8,8], index: 1, kind: input, shape index: {}]
  %s2 = inlined_call_operand.vmem [shape: s32[8], index: 2, kind: input, shape index: {}]
  %s3 = inlined_call_operand.vmem [shape: bf16[32,128], index: 3, kind: input, shape index: {}]
  %s4 = inlined_call_operand.hbm [shape: f32[256,128], index: 4, kind: input, shape index: {}]
  %s5 = inlined_call_operand.hbm [shape: bf16[128,256], index: 5, kind: input, shape index: {}]
  %s6 = inlined_call_operand.vmem [shape: s32[1,384], index: 6, kind: input, shape index: {}]
  %s7 = inlined_call_operand.vmem [shape: f32[8,384], index: 7, kind: output, shape index: {0}]
  %s8 = inlined_call_operand.vmem [shape: s32[8,128], index: 8, kind: output, shape index: {1}]
  %9 = xla_tuple %s7, %s8
  %s10 = sld [smem:[#allocation0]]
  $region82: #{align_forward.1} parent=0
    _
  %s12 = ssub.s32 1, %s10
  %s13 = scalar_select 0, %s12, %s10
  $region1: #{align_forward.1} parent=0
    #allocation4 [shape = 'u8[512]{0}', space=smem, size = 0x200, scoped, tag = 'input window, operand 2, single buffered']
    #allocation5 [shape = 's32[1]{0}', space=sflag, size = 0x4, scoped, tag = 'scoped memory for align_forward.1']
    #allocation6 [shape = 's32[1]{0}', space=sflag, size = 0x4, scoped, tag = 'scoped memory for align_forward.1']
    #allocation7 [shape = 'u8[65536]{0}', space=vmem, size = 0x10000, scoped, tag = 'input window, operand 5, single buffered']
    %14 = vsyncpa [#allocation6], 0
    %15 = vsyncpa [#allocation5], 0
    // Predicated region
    $region2: #{align_forward.1} parent=1 // pred_check
      _
    $region3: #{align_forward.1} parent=1 // pred_check_branch
      %17 = sbr.rel (0) target = $region5
    $region4: #{align_forward.1} parent=1 // pred_region
      _
    $region5: #{align_forward.1} parent=1 // pred_fallthru
      _
    // Predicated region
    $region6: #{align_forward.1} parent=1 // pred_check
      _
    $region7: #{align_forward.1} parent=1 // pred_check_branch
      %19 = sbr.rel (0) target = $region9
    $region8: #{align_forward.1} parent=1 // pred_region
      _
    $region9: #{align_forward.1} parent=1 // pred_fallthru
      _
    // Predicated region
    $region10: #{align_forward.1} parent=1 // pred_check
      _
    $region11: #{align_forward.1} parent=1 // pred_check_branch
      %21 = sbr.rel (0) target = $region13
    $region12: #{align_forward.1} parent=1 // pred_region
      %s23 = ssub.s32 16, 16
      %24 = vsyncadd [#allocation6], %s23
      %s26 = sshll.u32 %s2, 4
      %s27 = int_to_ptr.vmem [resolvable:$true] %s26
      %29 = dma.vmem_to_smem %s27, 16, [#allocation4], [#allocation6]
    $region13: #{align_forward.1} parent=1 // pred_fallthru
      _
    // Predicated region
    $region14: #{align_forward.1} parent=1 // pred_check
      _
    $region15: #{align_forward.1} parent=1 // pred_check_branch
      %31 = sbr.rel (0) target = $region17
    $region16: #{align_forward.1} parent=1 // pred_region
      _
    $region17: #{align_forward.1} parent=1 // pred_fallthru
      _
    // Predicated region
    $region18: #{align_forward.1} parent=1 // pred_check
      _
    $region19: #{align_forward.1} parent=1 // pred_check_branch
      %33 = sbr.rel (0) target = $region21
    $region20: #{align_forward.1} parent=1 // pred_region
      %s35 = ssub.s32 2048, 2048
      %36 = vsyncadd [#allocation5], %s35
      %s37 = sshll.u32 [#allocation7], 4
      %s38 = int_to_ptr.vmem [resolvable:$true] %s37
      %43 = dma.hbm_to_vmem [thread:$0]  %s5, 2048, %s38, [#allocation5], 128, 128, 8
    $region21: #{align_forward.1} parent=1 // pred_fallthru
      _
    // Predicated region
    $region22: #{align_forward.1} parent=1 // pred_check
      _
    $region23: #{align_forward.1} parent=1 // pred_check_branch
      %45 = sbr.rel (0) target = $region25
    $region24: #{align_forward.1} parent=1 // pred_region
      _
    $region25: #{align_forward.1} parent=1 // pred_fallthru
      _
    // Predicated region
    $region26: #{align_forward.1} parent=1 // pred_check
      _
    $region27: #{align_forward.1} parent=1 // pred_check_branch
      %47 = sbr.rel (0) target = $region29
    $region28: #{align_forward.1} parent=1 // pred_region
      %48 = dma.done [#allocation6], 16
    $region29: #{align_forward.1} parent=1 // pred_fallthru
      _
    // Predicated region
    $region30: #{align_forward.1} parent=1 // pred_check
      _
    $region31: #{align_forward.1} parent=1 // pred_check_branch
      %50 = sbr.rel (0) target = $region33
    $region32: #{align_forward.1} parent=1 // pred_region
      %51 = dma.done [#allocation5], 2048
    $region33: #{align_forward.1} parent=1 // pred_fallthru
      _
    %52 = sfence
    %s54 = sld [smem:[#allocation4]]
    %s55 = smul.addr %s54, 16
    %s56 = scalar_lea.hbm %s4, %s55
    // Predicated region
    $region34: #{align_forward.1} parent=1 // pred_check
      _
    $region35: #{align_forward.1} parent=1 // pred_check_branch
      %58 = sbr.rel target = $region37
    $region36: #{align_forward.1} parent=1 // pred_region
      %59 = sst [smem:[#allocation10]] [#allocation9]
      %60 = sst [smem:[#allocation11]] [#allocation8]
    $region37: #{align_forward.1} parent=1 // pred_fallthru
      _
    %62 = shalt.err (0)
    %s64 = sshll.u32 [#allocation2], 4
    %s65 = int_to_ptr.vmem [resolvable:$true] %s64
    %67 = dma.hbm_to_vmem [thread:$0]  %s56, 16, %s65, [#allocation3]
    %s68 = sld [smem:[#allocation4 + $0x1]]
    %s69 = smul.addr %s68, 16
    %s70 = scalar_lea.hbm %s4, %s69
    %s71 = scalar_lea.vmem [#allocation2], 1
    %s72 = scalar_lea.sflag [#allocation3], 1
    // Predicated region
    $region38: #{align_forward.1} parent=1 // pred_check
      _
    $region39: #{align_forward.1} parent=1 // pred_check_branch
      %74 = sbr.rel target = $region41
    $region40: #{align_forward.1} parent=1 // pred_region
      %75 = sst [smem:[#allocation10]] [#allocation13]
      %76 = sst [smem:[#allocation11]] [#allocation12]
    $region41: #{align_forward.1} parent=1 // pred_fallthru
      _
    %78 = shalt.err (0)
    %s80 = sshll.u32 %s71, 4
    %s81 = int_to_ptr.vmem [resolvable:$true] %s80
    %83 = dma.hbm_to_vmem [thread:$0]  %s70, 16, %s81, %s72
    %s84 = sld [smem:[#allocation4 + $0x2]]
    %s85 = smul.addr %s84, 16
    %s86 = scalar_lea.hbm %s4, %s85
    %s87 = scalar_lea.vmem [#allocation2], 2
    %s88 = scalar_lea.sflag [#allocation3], 2
    // Predicated region
    $region42: #{align_forward.1} parent=1 // pred_check
      _
    $region43: #{align_forward.1} parent=1 // pred_check_branch
      %90 = sbr.rel target = $region45
    $region44: #{align_forward.1} parent=1 // pred_region
      %91 = sst [smem:[#allocation10]] [#allocation15]
      %92 = sst [smem:[#allocation11]] [#allocation14]
    $region45: #{align_forward.1} parent=1 // pred_fallthru
      _
    %94 = shalt.err (0)
    %s96 = sshll.u32 %s87, 4
    %s97 = int_to_ptr.vmem [resolvable:$true] %s96
    %99 = dma.hbm_to_vmem [thread:$0]  %s86, 16, %s97, %s88
    %s100 = sld [smem:[#allocation4 + $0x3]]
    %s101 = smul.addr %s100, 16
    %s102 = scalar_lea.hbm %s4, %s101
    %s103 = scalar_lea.vmem [#allocation2], 3
    %s104 = scalar_lea.sflag [#allocation3], 3
    // Predicated region
    $region46: #{align_forward.1} parent=1 // pred_check
      _
    $region47: #{align_forward.1} parent=1 // pred_check_branch
      %106 = sbr.rel target = $region49
    $region48: #{align_forward.1} parent=1 // pred_region
      %107 = sst [smem:[#allocation10]] [#allocation17]
      %108 = sst [smem:[#allocation11]] [#allocation16]
    $region49: #{align_forward.1} parent=1 // pred_fallthru
      _
    %110 = shalt.err (0)
    %s112 = sshll.u32 %s103, 4
    %s113 = int_to_ptr.vmem [resolvable:$true] %s112
    %115 = dma.hbm_to_vmem [thread:$0]  %s102, 16, %s113, %s104
    %s116 = sld [smem:[#allocation4 + $0x4]]
    %s117 = smul.addr %s116, 16
    %s118 = scalar_lea.hbm %s4, %s117
    %s119 = scalar_lea.vmem [#allocation2], 4
    %s120 = scalar_lea.sflag [#allocation3], 4
    // Predicated region
    $region50: #{align_forward.1} parent=1 // pred_check
      _
    $region51: #{align_forward.1} parent=1 // pred_check_branch
      %122 = sbr.rel target = $region53
    $region52: #{align_forward.1} parent=1 // pred_region
      %123 = sst [smem:[#allocation10]] [#allocation19]
      %124 = sst [smem:[#allocation11]] [#allocation18]
    $region53: #{align_forward.1} parent=1 // pred_fallthru
      _
    %126 = shalt.err (0)
    %s128 = sshll.u32 %s119, 4
    %s129 = int_to_ptr.vmem [resolvable:$true] %s128
    %131 = dma.hbm_to_vmem [thread:$0]  %s118, 16, %s129, %s120
    %s132 = sld [smem:[#allocation4 + $0x5]]
    %s133 = smul.addr %s132, 16
    %s134 = scalar_lea.hbm %s4, %s133
    %s135 = scalar_lea.vmem [#allocation2], 5
    %s136 = scalar_lea.sflag [#allocation3], 5
    // Predicated region
    $region54: #{align_forward.1} parent=1 // pred_check
      _
    $region55: #{align_forward.1} parent=1 // pred_check_branch
      %138 = sbr.rel target = $region57
    $region56: #{align_forward.1} parent=1 // pred_region
      %139 = sst [smem:[#allocation10]] [#allocation21]
      %140 = sst [smem:[#allocation11]] [#allocation20]
    $region57: #{align_forward.1} parent=1 // pred_fallthru
      _
    %142 = shalt.err (0)
    %s144 = sshll.u32 %s135, 4
    %s145 = int_to_ptr.vmem [resolvable:$true] %s144
    %147 = dma.hbm_to_vmem [thread:$0]  %s134, 16, %s145, %s136
    %s148 = sld [smem:[#allocation4 + $0x6]]
    %s149 = smul.addr %s148, 16
    %s150 = scalar_lea.hbm %s4, %s149
    %s151 = scalar_lea.vmem [#allocation2], 6
    %s152 = scalar_lea.sflag [#allocation3], 6
    // Predicated region
    $region58: #{align_forward.1} parent=1 // pred_check
      _
    $region59: #{align_forward.1} parent=1 // pred_check_branch
      %154 = sbr.rel target = $region61
    $region60: #{align_forward.1} parent=1 // pred_region
      %155 = sst [smem:[#allocation10]] [#allocation23]
      %156 = sst [smem:[#allocation11]] [#allocation22]
    $region61: #{align_forward.1} parent=1 // pred_fallthru
      _
    %158 = shalt.err (0)
    %s160 = sshll.u32 %s151, 4
    %s161 = int_to_ptr.vmem [resolvable:$true] %s160
    %163 = dma.hbm_to_vmem [thread:$0]  %s150, 16, %s161, %s152
    %s164 = sld [smem:[#allocation4 + $0x7]]
    %s165 = smul.addr %s164, 16
    %s166 = scalar_lea.hbm %s4, %s165
    %s167 = scalar_lea.vmem [#allocation2], 7
    %s168 = scalar_lea.sflag [#allocation3], 7
    // Predicated region
    $region62: #{align_forward.1} parent=1 // pred_check
      _
    $region63: #{align_forward.1} parent=1 // pred_check_branch
      %170 = sbr.rel target = $region65
    $region64: #{align_forward.1} parent=1 // pred_region
      %171 = sst [smem:[#allocation10]] [#allocation25]
      %172 = sst [smem:[#allocation11]] [#allocation24]
    $region65: #{align_forward.1} parent=1 // pred_fallthru
      _
    %174 = shalt.err (0)
    %s176 = sshll.u32 %s167, 4
    %s177 = int_to_ptr.vmem [resolvable:$true] %s176
    %179 = dma.hbm_to_vmem [thread:$0]  %s166, 16, %s177, %s168
    %v180 = vld [vmem:[%s0] sm:$0xff]
    %v181 = vld [vmem:[%s0 + $0x8] sm:$0xff]
    %v182 = vld [vmem:[%s0 + $0x10] sm:$0xff]
    %v183 = vld [vmem:[%s0 + $0x18] sm:$0xff]
    %v184 = vld [vmem:[%s0 + $0x20] sm:$0xff]
    %v185 = vld [vmem:[%s0 + $0x28] sm:$0xff]
    %v186 = vld [vmem:[%s0 + $0x30] sm:$0xff]
    %v187 = vld [vmem:[%s0 + $0x38] sm:$0xff]
    %v188 = vld [vmem:[%s1] sm:$0xff]
    %v189 = vlaneseq
    %v190 = vshrl.u32 %v189, 7
    %v191 = vsub.s32 0, %v190
    %v192 = vrot.slane %v188, %v191
    %194 = vbcast.lane.b32.xlu0 %v192, 256
    %v195 = vpop.permute.xlu0 %194
    %v196 = vlaneseq
    %v197 = vshrl.u32 %v196, 7
    %v198 = vsub.s32 1, %v197
    %v199 = vrot.slane %v188, %v198
    %201 = vbcast.lane.b32.xlu0 %v199, 256
    %v202 = vpop.permute.xlu0 %201
    %v203 = vlaneseq
    %v204 = vshrl.u32 %v203, 7
    %v205 = vsub.s32 2, %v204
    %v206 = vrot.slane %v188, %v205
    %208 = vbcast.lane.b32.xlu0 %v206, 256
    %v209 = vpop.permute.xlu0 %208
    %v210 = vlaneseq
    %v211 = vshrl.u32 %v210, 7
    %v212 = vsub.s32 3, %v211
    %v213 = vrot.slane %v188, %v212
    %215 = vbcast.lane.b32.xlu0 %v213, 256
    %v216 = vpop.permute.xlu0 %215
    %v217 = vlaneseq
    %v218 = vshrl.u32 %v217, 7
    %v219 = vsub.s32 4, %v218
    %v220 = vrot.slane %v188, %v219
    %222 = vbcast.lane.b32.xlu0 %v220, 256
    %v223 = vpop.permute.xlu0 %222
    %v224 = vlaneseq
    %v225 = vshrl.u32 %v224, 7
    %v226 = vsub.s32 5, %v225
    %v227 = vrot.slane %v188, %v226
    %229 = vbcast.lane.b32.xlu0 %v227, 256
    %v230 = vpop.permute.xlu0 %229
    %v231 = vlaneseq
    %v232 = vshrl.u32 %v231, 7
    %v233 = vsub.s32 6, %v232
    %v234 = vrot.slane %v188, %v233
    %236 = vbcast.lane.b32.xlu0 %v234, 256
    %v237 = vpop.permute.xlu0 %236
    %v238 = vlaneseq
    %v239 = vshrl.u32 %v238, 7
    %v240 = vsub.s32 7, %v239
    %v241 = vrot.slane %v188, %v240
    %243 = vbcast.lane.b32.xlu0 %v241, 256
    %v244 = vpop.permute.xlu0 %243
    %v245 = vmul.f32 %v180, %v195
    %v246 = vmul.f32 %v181, %v202
    %v247 = vmul.f32 %v182, %v209
    %v248 = vmul.f32 %v183, %v216
    %v249 = vmul.f32 %v184, %v223
    %v250 = vmul.f32 %v185, %v230
    %v251 = vmul.f32 %v186, %v237
    %v252 = vmul.f32 %v187, %v244
    %vm253 = vcmask 261120
    %v254 = vsel %vm253, %v245, 0.0
    %v255 = vrot.slane %v254, 4
    %v256 = vadd.f32 %v254, %v255
    %v257 = vrot.slane %v256, 2
    %v258 = vadd.f32 %v256, %v257
    %v259 = vrot.slane %v258, 1
    %v260 = vadd.f32 %v258, %v259
    %v261 = vsel %vm253, %v246, 0.0
    %v262 = vrot.slane %v261, 4
    %v263 = vadd.f32 %v261, %v262
    %v264 = vrot.slane %v263, 2
    %v265 = vadd.f32 %v263, %v264
    %v266 = vrot.slane %v265, 1
    %v267 = vadd.f32 %v265, %v266
    %v268 = vsel %vm253, %v247, 0.0
    %v269 = vrot.slane %v268, 4
    %v270 = vadd.f32 %v268, %v269
    %v271 = vrot.slane %v270, 2
    %v272 = vadd.f32 %v270, %v271
    %v273 = vrot.slane %v272, 1
    %v274 = vadd.f32 %v272, %v273
    %v275 = vsel %vm253, %v248, 0.0
    %v276 = vrot.slane %v275, 4
    %v277 = vadd.f32 %v275, %v276
    %v278 = vrot.slane %v277, 2
    %v279 = vadd.f32 %v277, %v278
    %v280 = vrot.slane %v279, 1
    %v281 = vadd.f32 %v279, %v280
    %v282 = vsel %vm253, %v249, 0.0
    %v283 = vrot.slane %v282, 4
    %v284 = vadd.f32 %v282, %v283
    %v285 = vrot.slane %v284, 2
    %v286 = vadd.f32 %v284, %v285
    %v287 = vrot.slane %v286, 1
    %v288 = vadd.f32 %v286, %v287
    %v289 = vsel %vm253, %v250, 0.0
    %v290 = vrot.slane %v289, 4
    %v291 = vadd.f32 %v289, %v290
    %v292 = vrot.slane %v291, 2
    %v293 = vadd.f32 %v291, %v292
    %v294 = vrot.slane %v293, 1
    %v295 = vadd.f32 %v293, %v294
    %v296 = vsel %vm253, %v251, 0.0
    %v297 = vrot.slane %v296, 4
    %v298 = vadd.f32 %v296, %v297
    %v299 = vrot.slane %v298, 2
    %v300 = vadd.f32 %v298, %v299
    %v301 = vrot.slane %v300, 1
    %v302 = vadd.f32 %v300, %v301
    %v303 = vsel %vm253, %v252, 0.0
    %v304 = vrot.slane %v303, 4
    %v305 = vadd.f32 %v303, %v304
    %v306 = vrot.slane %v305, 2
    %v307 = vadd.f32 %v305, %v306
    %v308 = vrot.slane %v307, 1
    %v309 = vadd.f32 %v307, %v308
    %vm310 = vcmask 64512
    %v311 = vsel %vm310, %v188, 0.0
    %312 = vadd.xlane.f32.xlu0 %v311
    %v313 = vpop.xlane.xlu0 %312
    %v314 = vmax.f32 %v313, 1.0
    %v315 = vpack.c.bf16 %v260, %v260
    %v316 = vpack.c.bf16 %v267, %v267
    %v317 = vpack.c.bf16 %v274, %v274
    %v318 = vpack.c.bf16 %v281, %v281
    %v319 = vpack.c.bf16 %v288, %v288
    %v320 = vpack.c.bf16 %v295, %v295
    %v321 = vpack.c.bf16 %v302, %v302
    %v322 = vpack.c.bf16 %v309, %v309
    %v323 = vld [vmem:[%s3] sm:$0xf]
    %v324 = vld [vmem:[%s3 + $0x4] sm:$0xf]
    %v325 = vld [vmem:[%s3 + $0x8] sm:$0xf]
    %v326 = vld [vmem:[%s3 + $0xc] sm:$0xf]
    %v335 = vunpack.c.l.b16 %v315
    %v336 = vunpack.c.l.b16 %v316
    %v337 = vunpack.c.l.b16 %v317
    %v338 = vunpack.c.l.b16 %v318
    %v339 = vunpack.c.l.b16 %v319
    %v340 = vunpack.c.l.b16 %v320
    %v341 = vunpack.c.l.b16 %v321
    %v342 = vunpack.c.l.b16 %v322
    %vm343 = vcmask 1041409
    %v344 = vsel %vm343, %v336, %v335
    %vm345 = vcmask 1042434
    %v346 = vsel %vm345, %v337, %v344
    %vm347 = vcmask 1043459
    %v348 = vsel %vm347, %v338, %v346
    %vm349 = vcmask 1044484
    %v350 = vsel %vm349, %v339, %v348
    %vm351 = vcmask 1045509
    %v352 = vsel %vm351, %v340, %v350
    %vm353 = vcmask 1046534
    %v354 = vsel %vm353, %v341, %v352
    %vm355 = vcmask 1047559
    %v356 = vsel %vm355, %v342, %v354
    %v357 = vpack.c.b16 %v356, %v356
    %v362 = vunpack.c.l.b16 %v323
    %v363 = vunpack.c.l.b16 %v324
    %v364 = vunpack.c.l.b16 %v325
    %v365 = vunpack.c.l.b16 %v326
    %v366 = vpack.c.b16 %v363, %v362
    %v367 = vpack.c.b16 %v365, %v364
    %v371 = vsel %vm253, %v357, 0
    %373 = vmatprep.subr.bf16.mxu0 0
    %374 = vmatpush1.bf16.msra.mxu0 0
    %375 = vmatprep.subr.bf16.mxu0 0
    %376 = vmatpush1.bf16.msra.mxu0 0
    %377 = vmatprep.subr.bf16.mxu0 0
    %378 = vmatpush1.bf16.msra.mxu0 0
    %379 = vmatprep.subr.bf16.mxu0 0
    %380 = vmatpush1.bf16.msra.mxu0 0
    %381 = vmatprep.subr.bf16.mxu0 0
    %382 = vmatpush1.bf16.msra.mxu0 0
    %383 = vmatprep.subr.bf16.mxu0 0
    %384 = vmatpush1.bf16.msra.mxu0 0
    %385 = vmatprep.subr.bf16.mxu0 0
    %386 = vmatpush1.bf16.msra.mxu0 %v367
    %387 = vmatprep.subr.bf16.mxu0 0
    %388 = vmatpush1.bf16.msra.mxu0 %v366
    %389 = vmatprep.subr.bf16.mxu0 0
    %390 = vmatpush2.bf16.msra.mxu0 0
    %391 = vmatprep.subr.bf16.mxu0 0
    %392 = vmatpush2.bf16.msra.mxu0 0
    %393 = vmatprep.subr.bf16.mxu0 0
    %394 = vmatpush2.bf16.msra.mxu0 0
    %395 = vmatprep.subr.bf16.mxu0 0
    %396 = vmatpush2.bf16.msra.mxu0 0
    %397 = vmatprep.subr.bf16.mxu0 0
    %398 = vmatpush2.bf16.msra.mxu0 0
    %399 = vmatprep.subr.bf16.mxu0 0
    %400 = vmatpush2.bf16.msra.mxu0 0
    %401 = vmatprep.subr.bf16.mxu0 0
    %402 = vmatpush2.bf16.msra.mxu0 0
    %403 = vmatprep.subr.bf16.mxu0 0
    %404 = vmatpush2.bf16.msra.mxu0 0
    %405 = vmatprep.mubr.bf16.mxu0 0
    %406 = vmatmul.mubr.bf16.gmra.mxu0 %v371
    %v407 = vpop.f32.mrf.mxu0
    %v408 = vadd.f32 0.0, %v407
    %v409 = vpop.f32.mrf.mxu0
    %v410 = vpop.f32.mrf.mxu0
    %v411 = vpop.f32.mrf.mxu0
    %412 = vdwg.mxu0
    %v413 = vrcp.pop %v314
    %v414 = vmul.f32 %v408, %v413
    %416 = dma.done [#allocation3], 16
    %418 = dma.done %s72, 16
    %420 = dma.done %s88, 16
    %422 = dma.done %s104, 16
    %424 = dma.done %s120, 16
    %426 = dma.done %s136, 16
    %428 = dma.done %s152, 16
    %430 = dma.done %s168, 16
    %v431 = vld [vmem:[#allocation2] sm:$0xff]
    %v432 = vadd.f32 %v414, %v431
    %v433 = vtanh.pop %v432
    %v434 = vpack.c.bf16 %v433, %v433
    %v435 = vld [vmem:[#allocation7] sm:$0xff]
    %v436 = vld [vmem:[#allocation7 + $0x8] sm:$0xff]
    %v437 = vld [vmem:[#allocation7 + $0x10] sm:$0xff]
    %v438 = vld [vmem:[#allocation7 + $0x18] sm:$0xff]
    %v439 = vld [vmem:[#allocation7 + $0x20] sm:$0xff]
    %v440 = vld [vmem:[#allocation7 + $0x28] sm:$0xff]
    %v441 = vld [vmem:[#allocation7 + $0x30] sm:$0xff]
    %v442 = vld [vmem:[#allocation7 + $0x38] sm:$0xff]
    %v443 = vld [vmem:[#allocation7 + $0x40] sm:$0xff]
    %v444 = vld [vmem:[#allocation7 + $0x48] sm:$0xff]
    %v445 = vld [vmem:[#allocation7 + $0x50] sm:$0xff]
    %v446 = vld [vmem:[#allocation7 + $0x58] sm:$0xff]
    %v447 = vld [vmem:[#allocation7 + $0x60] sm:$0xff]
    %v448 = vld [vmem:[#allocation7 + $0x68] sm:$0xff]
    %v449 = vld [vmem:[#allocation7 + $0x70] sm:$0xff]
    %v450 = vld [vmem:[#allocation7 + $0x78] sm:$0xff]
    %v467 = vunpack.c.l.b16 %v435
    %v468 = vunpack.c.h.b16 %v435
    %v469 = vunpack.c.l.b16 %v436
    %v470 = vunpack.c.h.b16 %v436
    %v471 = vunpack.c.l.b16 %v437
    %v472 = vunpack.c.h.b16 %v437
    %v473 = vunpack.c.l.b16 %v438
    %v474 = vunpack.c.h.b16 %v438
    %v475 = vunpack.c.l.b16 %v439
    %v476 = vunpack.c.h.b16 %v439
    %v477 = vunpack.c.l.b16 %v440
    %v478 = vunpack.c.h.b16 %v440
    %v479 = vunpack.c.l.b16 %v441
    %v480 = vunpack.c.h.b16 %v441
    %v481 = vunpack.c.l.b16 %v442
    %v482 = vunpack.c.h.b16 %v442
    %v483 = vunpack.c.l.b16 %v443
    %v484 = vunpack.c.h.b16 %v443
    %v485 = vunpack.c.l.b16 %v444
    %v486 = vunpack.c.h.b16 %v444
    %v487 = vunpack.c.l.b16 %v445
    %v488 = vunpack.c.h.b16 %v445
    %v489 = vunpack.c.l.b16 %v446
    %v490 = vunpack.c.h.b16 %v446
    %v491 = vunpack.c.l.b16 %v447
    %v492 = vunpack.c.h.b16 %v447
    %v493 = vunpack.c.l.b16 %v448
    %v494 = vunpack.c.h.b16 %v448
    %v495 = vunpack.c.l.b16 %v449
    %v496 = vunpack.c.h.b16 %v449
    %v497 = vunpack.c.l.b16 %v450
    %v498 = vunpack.c.h.b16 %v450
    %v499 = vpack.c.b16 %v469, %v467
    %v500 = vpack.c.b16 %v470, %v468
    %v501 = vpack.c.b16 %v473, %v471
    %v502 = vpack.c.b16 %v474, %v472
    %v503 = vpack.c.b16 %v477, %v475
    %v504 = vpack.c.b16 %v478, %v476
    %v505 = vpack.c.b16 %v481, %v479
    %v506 = vpack.c.b16 %v482, %v480
    %v507 = vpack.c.b16 %v485, %v483
    %v508 = vpack.c.b16 %v486, %v484
    %v509 = vpack.c.b16 %v489, %v487
    %v510 = vpack.c.b16 %v490, %v488
    %v511 = vpack.c.b16 %v493, %v491
    %v512 = vpack.c.b16 %v494, %v492
    %v513 = vpack.c.b16 %v497, %v495
    %v514 = vpack.c.b16 %v498, %v496
    %531 = vmatprep.subr.bf16.mxu0 %v514
    %532 = vmatpush1.bf16.msra.mxu0 %v513
    %533 = vmatprep.subr.bf16.mxu0 %v512
    %534 = vmatpush1.bf16.msra.mxu0 %v511
    %535 = vmatprep.subr.bf16.mxu0 %v510
    %536 = vmatpush1.bf16.msra.mxu0 %v509
    %537 = vmatprep.subr.bf16.mxu0 %v508
    %538 = vmatpush1.bf16.msra.mxu0 %v507
    %539 = vmatprep.subr.bf16.mxu0 %v506
    %540 = vmatpush1.bf16.msra.mxu0 %v505
    %541 = vmatprep.subr.bf16.mxu0 %v504
    %542 = vmatpush1.bf16.msra.mxu0 %v503
    %543 = vmatprep.subr.bf16.mxu0 %v502
    %544 = vmatpush1.bf16.msra.mxu0 %v501
    %545 = vmatprep.subr.bf16.mxu0 %v500
    %546 = vmatpush1.bf16.msra.mxu0 %v499
    %547 = vmatprep.subr.bf16.mxu0 0
    %548 = vmatpush2.bf16.msra.mxu0 0
    %549 = vmatprep.subr.bf16.mxu0 0
    %550 = vmatpush2.bf16.msra.mxu0 0
    %551 = vmatprep.subr.bf16.mxu0 0
    %552 = vmatpush2.bf16.msra.mxu0 0
    %553 = vmatprep.subr.bf16.mxu0 0
    %554 = vmatpush2.bf16.msra.mxu0 0
    %555 = vmatprep.subr.bf16.mxu0 0
    %556 = vmatpush2.bf16.msra.mxu0 0
    %557 = vmatprep.subr.bf16.mxu0 0
    %558 = vmatpush2.bf16.msra.mxu0 0
    %559 = vmatprep.subr.bf16.mxu0 0
    %560 = vmatpush2.bf16.msra.mxu0 0
    %561 = vmatprep.subr.bf16.mxu0 0
    %562 = vmatpush2.bf16.msra.mxu0 0
    %563 = vmatprep.mubr.bf16.mxu0 0
    %564 = vmatmul.mubr.bf16.gmra.mxu0 %v434
    %v565 = vpop.f32.mrf.mxu0
    %v566 = vadd.f32 0.0, %v565
    %v567 = vpop.f32.mrf.mxu0
    %v568 = vadd.f32 0.0, %v567
    %v569 = vpop.f32.mrf.mxu0
    %v570 = vpop.f32.mrf.mxu0
    %571 = vdwg.mxu0
    %v572 = vlaneseq
    %v573 = vand.u32 %v572, 127
    %v574 = vadd.s32 %v573, 128
    %v575 = vmax.f32 %v566, %v568
    %576 = vmax.xlane.f32.xlu0 %v575
    %v577 = vpop.xlane.xlu0 %576
    %vm578 = vcmp.eq.f32.partialorder %v566, %v577
    %vm579 = vcmp.eq.f32.partialorder %v568, %v577
    %v580 = vsel %vm578, %v573, 256
    %v581 = vsel %vm579, %v574, 256
    %vm582 = vcmp.lt.s32.totalorder %v580, %v581
    %v583 = vsel %vm582, %v580, %v581
    %v584 = vand.u32 %v583, 65535
    %v585 = vshra.s32 %v583, 16
    %v586 = vcvt.s32.f32 %v584
    %v587 = vcvt.s32.f32 %v585
    %588 = vmin.xlane.f32.xlu0 %v587
    %v589 = vpop.xlane.xlu0 %588
    %vm590 = vcmp.eq.f32.partialorder %v587, %v589
    %v591 = vsel %vm590, %v586, inf
    %592 = vmin.xlane.f32.xlu0 %v591
    %v593 = vpop.xlane.xlu0 %592
    %v594 = vcvt.f32.s32 %v593
    %v595 = vcvt.f32.s32 %v589
    %v596 = vshll.u32 %v595, 16
    %v597 = vadd.s32 %v596, %v594
    %vm598 = vcmp.eq.s32.totalorder %v573, %v597
    %vm599 = vcmp.eq.s32.totalorder %v574, %v597
    %v600 = vsel %vm598, -3.4028235e+38, %v566
    %v601 = vsel %vm599, -3.4028235e+38, %v568
    %v602 = vmax.f32 %v600, %v601
    %603 = vmax.xlane.f32.xlu0 %v602
    %v604 = vpop.xlane.xlu0 %603
    %vm605 = vcmp.eq.f32.partialorder %v600, %v604
    %vm606 = vcmp.eq.f32.partialorder %v601, %v604
    %v607 = vsel %vm605, %v573, 256
    %v608 = vsel %vm606, %v574, 256
    %vm609 = vcmp.lt.s32.totalorder %v607, %v608
    %v610 = vsel %vm609, %v607, %v608
    %v611 = vand.u32 %v610, 65535
    %v612 = vshra.s32 %v610, 16
    %v613 = vcvt.s32.f32 %v611
    %v614 = vcvt.s32.f32 %v612
    %615 = vmin.xlane.f32.xlu0 %v614
    %v616 = vpop.xlane.xlu0 %615
    %vm617 = vcmp.eq.f32.partialorder %v614, %v616
    %v618 = vsel %vm617, %v613, inf
    %619 = vmin.xlane.f32.xlu0 %v618
    %v620 = vpop.xlane.xlu0 %619
    %v621 = vcvt.f32.s32 %v620
    %v622 = vcvt.f32.s32 %v616
    %v623 = vshll.u32 %v622, 16
    %v624 = vadd.s32 %v623, %v621
    %vm625 = vcmp.eq.s32.totalorder %v573, %v624
    %vm626 = vcmp.eq.s32.totalorder %v574, %v624
    %v627 = vsel %vm625, -3.4028235e+38, %v600
    %v628 = vsel %vm626, -3.4028235e+38, %v601
    %v629 = vmax.f32 %v627, %v628
    %630 = vmax.xlane.f32.xlu0 %v629
    %v631 = vpop.xlane.xlu0 %630
    %vm632 = vcmp.eq.f32.partialorder %v627, %v631
    %vm633 = vcmp.eq.f32.partialorder %v628, %v631
    %v634 = vsel %vm632, %v573, 256
    %v635 = vsel %vm633, %v574, 256
    %vm636 = vcmp.lt.s32.totalorder %v634, %v635
    %v637 = vsel %vm636, %v634, %v635
    %v638 = vand.u32 %v637, 65535
    %v639 = vshra.s32 %v637, 16
    %v640 = vcvt.s32.f32 %v638
    %v641 = vcvt.s32.f32 %v639
    %642 = vmin.xlane.f32.xlu0 %v641
    %v643 = vpop.xlane.xlu0 %642
    %vm644 = vcmp.eq.f32.partialorder %v641, %v643
    %v645 = vsel %vm644, %v640, inf
    %646 = vmin.xlane.f32.xlu0 %v645
    %v647 = vpop.xlane.xlu0 %646
    %v648 = vcvt.f32.s32 %v647
    %v649 = vcvt.f32.s32 %v643
    %v650 = vshll.u32 %v649, 16
    %v651 = vadd.s32 %v650, %v648
    %vm652 = vcmp.eq.s32.totalorder %v573, %v651
    %vm653 = vcmp.eq.s32.totalorder %v574, %v651
    %v654 = vsel %vm652, -3.4028235e+38, %v627
    %v655 = vsel %vm653, -3.4028235e+38, %v628
    %v656 = vmax.f32 %v654, %v655
    %657 = vmax.xlane.f32.xlu0 %v656
    %v658 = vpop.xlane.xlu0 %657
    %vm659 = vcmp.eq.f32.partialorder %v654, %v658
    %vm660 = vcmp.eq.f32.partialorder %v655, %v658
    %v661 = vsel %vm659, %v573, 256
    %v662 = vsel %vm660, %v574, 256
    %vm663 = vcmp.lt.s32.totalorder %v661, %v662
    %v664 = vsel %vm663, %v661, %v662
    %v665 = vand.u32 %v664, 65535
    %v666 = vshra.s32 %v664, 16
    %v667 = vcvt.s32.f32 %v665
    %v668 = vcvt.s32.f32 %v666
    %669 = vmin.xlane.f32.xlu0 %v668
    %v670 = vpop.xlane.xlu0 %669
    %vm671 = vcmp.eq.f32.partialorder %v668, %v670
    %v672 = vsel %vm671, %v667, inf
    %673 = vmin.xlane.f32.xlu0 %v672
    %v674 = vpop.xlane.xlu0 %673
    %v675 = vcvt.f32.s32 %v674
    %v676 = vcvt.f32.s32 %v670
    %v677 = vshll.u32 %v676, 16
    %v678 = vadd.s32 %v677, %v675
    %vm679 = vcmp.eq.s32.totalorder %v573, %v678
    %vm680 = vcmp.eq.s32.totalorder %v574, %v678
    %v681 = vsel %vm679, -3.4028235e+38, %v654
    %v682 = vsel %vm680, -3.4028235e+38, %v655
    %v683 = vmax.f32 %v681, %v682
    %684 = vmax.xlane.f32.xlu0 %v683
    %v685 = vpop.xlane.xlu0 %684
    %vm686 = vcmp.eq.f32.partialorder %v681, %v685
    %vm687 = vcmp.eq.f32.partialorder %v682, %v685
    %v688 = vsel %vm686, %v573, 256
    %v689 = vsel %vm687, %v574, 256
    %vm690 = vcmp.lt.s32.totalorder %v688, %v689
    %v691 = vsel %vm690, %v688, %v689
    %v692 = vand.u32 %v691, 65535
    %v693 = vshra.s32 %v691, 16
    %v694 = vcvt.s32.f32 %v692
    %v695 = vcvt.s32.f32 %v693
    %696 = vmin.xlane.f32.xlu0 %v695
    %v697 = vpop.xlane.xlu0 %696
    %vm698 = vcmp.eq.f32.partialorder %v695, %v697
    %v699 = vsel %vm698, %v694, inf
    %700 = vmin.xlane.f32.xlu0 %v699
    %v701 = vpop.xlane.xlu0 %700
    %v702 = vcvt.f32.s32 %v701
    %v703 = vcvt.f32.s32 %v697
    %v704 = vshll.u32 %v703, 16
    %v705 = vadd.s32 %v704, %v702
    %v706 = vsub.f32 %v577, %v577
    %v707 = vmul.f32 %v706, 1.442695
    %v708 = vpow.pop %v707
    %v709 = vsub.f32 %v604, %v577
    %v710 = vmul.f32 %v709, 1.442695
    %v711 = vpow.pop %v710
    %v712 = vsub.f32 %v631, %v577
    %v713 = vmul.f32 %v712, 1.442695
    %v714 = vpow.pop %v713
    %v715 = vsub.f32 %v658, %v577
    %v716 = vmul.f32 %v715, 1.442695
    %v717 = vpow.pop %v716
    %v718 = vsub.f32 %v685, %v577
    %v719 = vmul.f32 %v718, 1.442695
    %v720 = vpow.pop %v719
    %v721 = vadd.f32 %v708, %v711
    %v722 = vadd.f32 %v721, %v714
    %v723 = vadd.f32 %v722, %v717
    %v724 = vadd.f32 %v723, %v720
    %v725 = vrcp.pop %v724
    %v726 = vmul.f32 %v708, %v725
    %v727 = vmul.f32 %v711, %v725
    %v728 = vmul.f32 %v714, %v725
    %v729 = vmul.f32 %v717, %v725
    %v730 = vmul.f32 %v720, %v725
    %v731 = vld [vmem:[%s6] sm:$0x7]
    %v732 = vlaneseq
    %v733 = vshrl.u32 %v732, 7
    %v734 = vsub.s32 0, %v733
    %v735 = vrot.slane %v731, %v734
    %v736 = vlaneseq
    %v737 = vshrl.u32 %v736, 7
    %v738 = vsub.s32 1, %v737
    %v739 = vrot.slane %v731, %v738
    %v740 = vlaneseq
    %v741 = vshrl.u32 %v740, 7
    %v742 = vsub.s32 2, %v741
    %v743 = vrot.slane %v731, %v742
    %vm744 = vcmp.eq.s32.totalorder %v735, %v597
    %vm745 = vcmp.eq.s32.totalorder %v739, %v597
    %vm746 = vcmp.eq.s32.totalorder %v743, %v597
    %v747 = vsel %vm744, %v726, 0.0
    %v748 = vsel %vm745, %v726, 0.0
    %v749 = vsel %vm746, %v726, 0.0
    %v750 = vadd.f32 %v747, 0.0
    %v751 = vadd.f32 %v748, 0.0
    %v752 = vadd.f32 %v749, 0.0
    %vm753 = vcmp.eq.s32.totalorder %v735, %v624
    %vm754 = vcmp.eq.s32.totalorder %v739, %v624
    %vm755 = vcmp.eq.s32.totalorder %v743, %v624
    %v756 = vsel %vm753, %v727, 0.0
    %v757 = vsel %vm754, %v727, 0.0
    %v758 = vsel %vm755, %v727, 0.0
    %v759 = vadd.f32 %v750, %v756
    %v760 = vadd.f32 %v751, %v757
    %v761 = vadd.f32 %v752, %v758
    %vm762 = vcmp.eq.s32.totalorder %v735, %v651
    %vm763 = vcmp.eq.s32.totalorder %v739, %v651
    %vm764 = vcmp.eq.s32.totalorder %v743, %v651
    %v765 = vsel %vm762, %v728, 0.0
    %v766 = vsel %vm763, %v728, 0.0
    %v767 = vsel %vm764, %v728, 0.0
    %v768 = vadd.f32 %v759, %v765
    %v769 = vadd.f32 %v760, %v766
    %v770 = vadd.f32 %v761, %v767
    %vm771 = vcmp.eq.s32.totalorder %v735, %v678
    %vm772 = vcmp.eq.s32.totalorder %v739, %v678
    %vm773 = vcmp.eq.s32.totalorder %v743, %v678
    %v774 = vsel %vm771, %v729, 0.0
    %v775 = vsel %vm772, %v729, 0.0
    %v776 = vsel %vm773, %v729, 0.0
    %v777 = vadd.f32 %v768, %v774
    %v778 = vadd.f32 %v769, %v775
    %v779 = vadd.f32 %v770, %v776
    %vm780 = vcmp.eq.s32.totalorder %v735, %v705
    %vm781 = vcmp.eq.s32.totalorder %v739, %v705
    %vm782 = vcmp.eq.s32.totalorder %v743, %v705
    %v783 = vsel %vm780, %v730, 0.0
    %v784 = vsel %vm781, %v730, 0.0
    %v785 = vsel %vm782, %v730, 0.0
    %v786 = vadd.f32 %v777, %v783
    %v787 = vadd.f32 %v778, %v784
    %v788 = vadd.f32 %v779, %v785
    %789 = vst [vmem:[%s7] sm:$0xff] %v786
    %790 = vst [vmem:[%s7 + $0x8] sm:$0xff] %v787
    %791 = vst [vmem:[%s7 + $0x10] sm:$0xff] %v788
    %v792 = vadd.s32 %v573, 256
    %v793 = vmax.f32 %v786, %v787
    %v794 = vmax.f32 %v793, %v788
    %795 = vmax.xlane.f32.xlu0 %v794
    %v796 = vpop.xlane.xlu0 %795
    %vm797 = vcmp.eq.f32.partialorder %v786, %v796
    %vm798 = vcmp.eq.f32.partialorder %v787, %v796
    %vm799 = vcmp.eq.f32.partialorder %v788, %v796
    %v800 = vsel %vm797, %v573, 384
    %v801 = vsel %vm798, %v574, 384
    %v802 = vsel %vm799, %v792, 384
    %vm803 = vcmp.lt.s32.totalorder %v800, %v801
    %v804 = vsel %vm803, %v800, %v801
    %vm805 = vcmp.lt.s32.totalorder %v804, %v802
    %v806 = vsel %vm805, %v804, %v802
    %v807 = vand.u32 %v806, 65535
    %v808 = vshra.s32 %v806, 16
    %v809 = vcvt.s32.f32 %v807
    %v810 = vcvt.s32.f32 %v808
    %811 = vmin.xlane.f32.xlu0 %v810
    %v812 = vpop.xlane.xlu0 %811
    %vm813 = vcmp.eq.f32.partialorder %v810, %v812
    %v814 = vsel %vm813, %v809, inf
    %815 = vmin.xlane.f32.xlu0 %v814
    %v816 = vpop.xlane.xlu0 %815
    %v817 = vcvt.f32.s32 %v816
    %v818 = vcvt.f32.s32 %v812
    %v819 = vshll.u32 %v818, 16
    %v820 = vadd.s32 %v819, %v817
    %vm821 = vcmp.eq.s32.totalorder %v573, 0
    %v822 = vsel %vm821, %v597, 0
    %vm823 = vcmp.eq.s32.totalorder %v573, 1
    %v824 = vsel %vm823, %v820, 0
    %v825 = vadd.s32 %v822, %v824
    %826 = vst [vmem:[%s8] sm:$0xff] %v825
    // Predicated region
    $region66: #{align_forward.1} parent=1 // pred_check
      _
    $region67: #{align_forward.1} parent=1 // pred_check_branch
      %828 = sbr.rel (0) target = $region69
    $region68: #{align_forward.1} parent=1 // pred_region
      _
    $region69: #{align_forward.1} parent=1 // pred_fallthru
      _
    // Predicated region
    $region70: #{align_forward.1} parent=1 // pred_check
      _
    $region71: #{align_forward.1} parent=1 // pred_check_branch
      %830 = sbr.rel (0) target = $region73
    $region72: #{align_forward.1} parent=1 // pred_region
      _
    $region73: #{align_forward.1} parent=1 // pred_fallthru
      _
    // Predicated region
    $region74: #{align_forward.1} parent=1 // pred_check
      _
    $region75: #{align_forward.1} parent=1 // pred_check_branch
      %832 = sbr.rel (0) target = $region77
    $region76: #{align_forward.1} parent=1 // pred_region
      _
    $region77: #{align_forward.1} parent=1 // pred_fallthru
      _
    // Predicated region
    $region78: #{align_forward.1} parent=1 // pred_check
      _
    $region79: #{align_forward.1} parent=1 // pred_check_branch
      %834 = sbr.rel (0) target = $region81
    $region80: #{align_forward.1} parent=1 // pred_region
      _
    $region81: #{align_forward.1} parent=1 // pred_fallthru
      _
    %835 = vsyncpa [#allocation5], 1
    %836 = vsyncpa [#allocation6], 1
  %837 = vsyncmov [#allocation3]
  %s838 = vpop.sfrf %837
  %p839 = scmp.eq.s32.totalorder %s838, 0
  %p840 = pneg %p839
  %842 = shalt.err (%p840)
  %s843 = scalar_lea.sflag [#allocation3], 1
  %844 = vsyncmov %s843
  %s845 = vpop.sfrf %844
  %p846 = scmp.eq.s32.totalorder %s845, 0
  %p847 = pneg %p846
  %849 = shalt.err (%p847)
  %s850 = scalar_lea.sflag [#allocation3], 2
  %851 = vsyncmov %s850
  %s852 = vpop.sfrf %851
  %p853 = scmp.eq.s32.totalorder %s852, 0
  %p854 = pneg %p853
  %856 = shalt.err (%p854)
  %s857 = scalar_lea.sflag [#allocation3], 3
  %858 = vsyncmov %s857
  %s859 = vpop.sfrf %858
  %p860 = scmp.eq.s32.totalorder %s859, 0
  %p861 = pneg %p860
  %863 = shalt.err (%p861)
  %s864 = scalar_lea.sflag [#allocation3], 4
  %865 = vsyncmov %s864
  %s866 = vpop.sfrf %865
  %p867 = scmp.eq.s32.totalorder %s866, 0
  %p868 = pneg %p867
  %870 = shalt.err (%p868)
  %s871 = scalar_lea.sflag [#allocation3], 5
  %872 = vsyncmov %s871
  %s873 = vpop.sfrf %872
  %p874 = scmp.eq.s32.totalorder %s873, 0
  %p875 = pneg %p874
  %877 = shalt.err (%p875)
  %s878 = scalar_lea.sflag [#allocation3], 6
  %879 = vsyncmov %s878
  %s880 = vpop.sfrf %879
  %p881 = scmp.eq.s32.totalorder %s880, 0
  %p882 = pneg %p881
  %884 = shalt.err (%p882)
  %s885 = scalar_lea.sflag [#allocation3], 7
  %886 = vsyncmov %s885
  %s887 = vpop.sfrf %886
  %p888 = scmp.eq.s32.totalorder %s887, 0
  %p889 = pneg %p888
  %891 = shalt.err (%p889)

</llo_original>
